<compile_context>
chip_gen: v7x
topology: tpu7x:2x2x1
jax: 0.10.0
libtpu: 0.0.40
codegen_flags: <defaults>
</compile_context>

<pallas_src>
import functools

import numpy as np

import jax
import jax.numpy as jnp
from jax import lax
from jax.experimental import pallas as pl
from jax.experimental.pallas import tpu as pltpu

EPS = 1e-5
LP = 128  # lane width every working tensor is padded to


def resblock_kernel(x_ref, mats_ref, shifts_ref, vecs_ref, out_ref, *, inv_count):
    f32 = jnp.float32
    x = x_ref[...]                                    # (NH, LP), lanes >= W*CI are 0

    # packed per-channel params, already tiled over w and zero-padded to LP lanes
    g0, b0 = vecs_ref[0:1, :], vecs_ref[1:2, :]
    bias0 = vecs_ref[2:3, :]
    g1, b1 = vecs_ref[3:4, :], vecs_ref[4:5, :]

    s_dn = shifts_ref[0]                              # (NH, NH): row r <- row r-1 (0 at image top)
    s_up = shifts_ref[1]                              # (NH, NH): row r <- row r+1 (0 at image bottom)

    def bn_relu(t, fold, gamma, beta):
        # Single-pass batch stats. `fold` sums lanes of equal channel, so
        # sum_rows(t @ fold) / (N*H*W) is E[x_c] broadcast back to lane-dense form.
        mean = jnp.sum(jnp.dot(t, fold, preferred_element_type=f32),
                       axis=0, keepdims=True) * inv_count
        ex2 = jnp.sum(jnp.dot(t * t, fold, preferred_element_type=f32),
                      axis=0, keepdims=True) * inv_count
        var = jnp.maximum(ex2 - mean * mean, 0.0)     # clamp: E[x^2]-E[x]^2 cancellation
        return jnp.maximum((t - mean) * lax.rsqrt(var + EPS) * gamma + beta, 0.0)

    def conv3x3(t, base):
        # dy = -1 / 0 / +1 row taps via shift matmuls; dx+channel mix is inside
        # the banded weights mats_ref[base + dy].
        t_dn = jnp.dot(s_dn, t, preferred_element_type=f32)
        t_up = jnp.dot(s_up, t, preferred_element_type=f32)
        acc = jnp.dot(t_dn, mats_ref[base + 0], preferred_element_type=f32)
        acc = acc + jnp.dot(t, mats_ref[base + 1], preferred_element_type=f32)
        acc = acc + jnp.dot(t_up, mats_ref[base + 2], preferred_element_type=f32)
        return acc

    o1 = bn_relu(x, mats_ref[0], g0, b0)              # relu(bn0(x))
    y = conv3x3(o1, 3) + bias0                        # conv0 (3x3, pad 1, bias)
    o2 = bn_relu(y, mats_ref[1], g1, b1)              # relu(bn1(y))
    z = conv3x3(o2, 6)                                # conv1 (3x3, pad 1, no bias)
    skip = jnp.dot(o1, mats_ref[2], preferred_element_type=f32)   # convdim 1x1

    out_ref[...] = (z + skip).astype(out_ref.dtype)


def _pack_params(params, N, H, W, CI, CO):
    """Build the lane-dense packed operands (pure XLA, traced in the wrapper)."""
    WCI, WCO = W * CI, W * CO
    NH = N * H
    f32 = jnp.float32

    w0 = params["w0"].astype(f32)                     # (3, 3, CI, CO)  HWIO
    w1 = params["w1"].astype(f32)                     # (3, 3, CO, CO)
    wd = params["wd"].astype(f32)                     # (CI, CO)

    # dx selector: sel[dx, w_in, w_out] = 1 iff w_in == w_out + dx - 1  (pad=1 conv)
    wi = np.arange(W)[:, None]
    wo = np.arange(W)[None, :]
    sel = jnp.asarray(np.stack([(wi == wo + dx - 1) for dx in range(3)], 0)
                      .astype(np.float32))            # (3, W, W)

    def banded(w_hwio, cin, cout):
        # (3, W*cin, W*cout): block (w_in, w_out) = w_hwio[dy, w_in - w_out + 1]
        b = jnp.einsum("xab,yxio->yaibo", sel, w_hwio)
        return b.reshape(3, W * cin, W * cout)

    def pad2(m):
        return jnp.pad(m, ((0, LP - m.shape[0]), (0, LP - m.shape[1])))

    wb0 = banded(w0, CI, CO)                          # (3, WCI, WCO)
    wb1 = banded(w1, CO, CO)                          # (3, WCO, WCO)

    # per-channel fold matrices: ones where lane channels match
    ch0 = np.arange(WCI) % CI
    ch1 = np.arange(WCO) % CO
    m0 = jnp.asarray((ch0[:, None] == ch0[None, :]).astype(np.float32))
    m1 = jnp.asarray((ch1[:, None] == ch1[None, :]).astype(np.float32))

    # 1x1 skip conv as a block-diagonal (WCI, WCO) matrix
    wdfull = jnp.einsum("ab,io->aibo", jnp.eye(W, dtype=f32), wd).reshape(WCI, WCO)

    mats = jnp.stack([pad2(m0), pad2(m1), pad2(wdfull),
                      pad2(wb0[0]), pad2(wb0[1]), pad2(wb0[2]),
                      pad2(wb1[0]), pad2(wb1[1]), pad2(wb1[2])], 0)   # (9, LP, LP)

    # +/-1 row-shift matrices with the per-image zero halo baked in
    r = np.arange(NH)
    s_dn = np.zeros((NH, NH), np.float32)
    ok = (r % H) != 0
    s_dn[r[ok], r[ok] - 1] = 1.0
    s_up = np.zeros((NH, NH), np.float32)
    ok = (r % H) != H - 1
    s_up[r[ok], r[ok] + 1] = 1.0
    shifts = jnp.asarray(np.stack([s_dn, s_up], 0))   # (2, NH, NH)

    # per-channel vectors tiled over w, zero-padded to LP, packed into (8, LP)
    def widen(v, c):
        v = jnp.tile(v.astype(f32).reshape(-1), W)    # lane layout (w, c)
        return jnp.pad(v, (0, LP - W * c))
    zeros = jnp.zeros((LP,), f32)
    vecs = jnp.stack([widen(params["g0"], CI), widen(params["be0"], CI),
                      widen(params["bias0"], CO), widen(params["g1"], CO),
                      widen(params["be1"], CO), zeros, zeros, zeros], 0)  # (8, LP)

    return mats, shifts, vecs


def resblock_forward(x_nchw, params):
    """x_nchw: (N, ni, H, W) float32. Returns (N, no, H, W)."""
    N, CI, H, W = x_nchw.shape
    CO = params["w0"].shape[-1]
    WCI, WCO = W * CI, W * CO
    NH = N * H
    assert WCI <= LP and WCO <= LP, "lane-dense packing assumes W*C <= 128"

    # lane-dense input: NCHW -> NHWC -> (N*H, W*CI) -> zero-pad lanes to 128
    x2d = jnp.transpose(x_nchw, (0, 2, 3, 1)).astype(jnp.float32).reshape(NH, WCI)
    x2d = jnp.pad(x2d, ((0, 0), (0, LP - WCI)))

    mats, shifts, vecs = _pack_params(params, N, H, W, CI, CO)

    kern = functools.partial(resblock_kernel, inv_count=1.0 / (N * H * W))
    out2d = pl.pallas_call(
        kern,
        out_shape=jax.ShapeDtypeStruct((NH, LP), jnp.float32),
        grid=(1,),
        in_specs=[
            pl.BlockSpec((NH, LP), lambda i: (0, 0)),
            pl.BlockSpec((9, LP, LP), lambda i: (0, 0, 0)),
            pl.BlockSpec((2, NH, NH), lambda i: (0, 0, 0)),
            pl.BlockSpec((8, LP), lambda i: (0, 0)),
        ],
        out_specs=pl.BlockSpec((NH, LP), lambda i: (0, 0)),
        compiler_params=pltpu.CompilerParams(
            dimension_semantics=("arbitrary",),
            vmem_limit_bytes=32 * 1024 * 1024),
    )(x2d, mats, shifts, vecs)

    out = out2d[:, :WCO].reshape(N, H, W, CO)         # drop lane padding (no-op here)
    return jnp.transpose(out, (0, 3, 1, 2))           # back to NCHW


def resblock_reference(x_nchw, params):
    """Pure-JAX reference mirroring the PyTorch forward (NHWC internally)."""
    x = jnp.transpose(x_nchw, (0, 2, 3, 1)).astype(jnp.float32)
    CI = x.shape[-1]
    CO = params["w0"].shape[-1]

    def bn_relu(t, g, b):
        m = t.mean(axis=(0, 1, 2), keepdims=True)
        v = ((t - m) ** 2).mean(axis=(0, 1, 2), keepdims=True)
        return jnp.maximum((t - m) / jnp.sqrt(v + EPS)
                           * g.reshape(1, 1, 1, -1) + b.reshape(1, 1, 1, -1), 0.0)

    dn = ("NHWC", "HWIO", "NHWC")
    o1 = bn_relu(x, params["g0"], params["be0"])
    y = lax.conv_general_dilated(o1, params["w0"], (1, 1), [(1, 1), (1, 1)],
                                 dimension_numbers=dn) \
        + params["bias0"].reshape(1, 1, 1, -1)
    o2 = bn_relu(y, params["g1"], params["be1"])
    z = lax.conv_general_dilated(o2, params["w1"], (1, 1), [(1, 1), (1, 1)],
                                 dimension_numbers=dn)
    skip = lax.conv_general_dilated(o1, params["wd"].reshape(1, 1, CI, CO),
                                    (1, 1), [(0, 0), (0, 0)],
                                    dimension_numbers=dn)
    return jnp.transpose(z + skip, (0, 3, 1, 2))


if __name__ == "__main__":
    ni, no = 4, 8
    N, H, W = 2, 16, 16

    key = jax.random.PRNGKey(0)
    ks = jax.random.split(key, 9)
    x = jax.random.normal(ks[0], (N, ni, H, W), jnp.float32)       # NCHW input

    params = {
        "g0":    1.0 + 0.1 * jax.random.normal(ks[1], (ni,), jnp.float32),
        "be0":   0.1 * jax.random.normal(ks[2], (ni,), jnp.float32),
        "w0":    0.2 * jax.random.normal(ks[3], (3, 3, ni, no), jnp.float32),
        "bias0": 0.1 * jax.random.normal(ks[4], (no,), jnp.float32),
        "g1":    1.0 + 0.1 * jax.random.normal(ks[5], (no,), jnp.float32),
        "be1":   0.1 * jax.random.normal(ks[6], (no,), jnp.float32),
        "w1":    0.2 * jax.random.normal(ks[7], (3, 3, no, no), jnp.float32),
        "wd":    0.2 * jax.random.normal(ks[8], (ni, no), jnp.float32),
    }

    out = jax.block_until_ready(resblock_forward(x, params))
    ref = resblock_reference(x, params)
    assert out.shape == (N, no, H, W), out.shape
    assert jnp.allclose(out, ref, atol=1e-3, rtol=1e-3), \
        float(jnp.max(jnp.abs(out - ref)))
    print("KERNEL_OK")
</pallas_src>

<mosaic_0001>
module attributes {stable_mosaic.version = 11 : i64} {
  func.func @resblock_kernel(%arg0: i32, %arg1: memref<32x128xf32, #tpu.memory_space<vmem>>, %arg2: memref<9x128x128xf32, #tpu.memory_space<vmem>>, %arg3: memref<2x32x32xf32, #tpu.memory_space<vmem>>, %arg4: memref<8x128xf32, #tpu.memory_space<vmem>>, %arg5: memref<32x128xf32, #tpu.memory_space<vmem>>) attributes {dimension_semantics = [#tpu.dimension_semantics<arbitrary>], iteration_bounds = array<i64: 1>, scalar_prefetch = 0 : i64, scratch_operands = 0 : i64, tpu.core_type = #tpu.core_type<tc>, window_params = [{pipeline_mode = #tpu.pipeline_mode<synchronous>, transform_indices = @transform_0, window_bounds = array<i64: 32, 128>}, {pipeline_mode = #tpu.pipeline_mode<synchronous>, transform_indices = @transform_1, window_bounds = array<i64: 9, 128, 128>}, {pipeline_mode = #tpu.pipeline_mode<synchronous>, transform_indices = @transform_2, window_bounds = array<i64: 2, 32, 32>}, {pipeline_mode = #tpu.pipeline_mode<synchronous>, transform_indices = @transform_3, window_bounds = array<i64: 8, 128>}, {pipeline_mode = #tpu.pipeline_mode<synchronous>, transform_indices = @transform_4, window_bounds = array<i64: 32, 128>}]} {
    %c0 = arith.constant 0 : index
    %c0_0 = arith.constant 0 : index
    %0 = vector.load %arg1[%c0, %c0_0] : memref<32x128xf32, #tpu.memory_space<vmem>>, vector<32x128xf32>
    %c0_1 = arith.constant 0 : index
    %c0_2 = arith.constant 0 : index
    %1 = vector.load %arg4[%c0_1, %c0_2] : memref<8x128xf32, #tpu.memory_space<vmem>>, vector<1x128xf32>
    %c1 = arith.constant 1 : index
    %c0_3 = arith.constant 0 : index
    %2 = vector.load %arg4[%c1, %c0_3] : memref<8x128xf32, #tpu.memory_space<vmem>>, vector<1x128xf32>
    %c2 = arith.constant 2 : index
    %c0_4 = arith.constant 0 : index
    %3 = vector.load %arg4[%c2, %c0_4] : memref<8x128xf32, #tpu.memory_space<vmem>>, vector<1x128xf32>
    %c3 = arith.constant 3 : index
    %c0_5 = arith.constant 0 : index
    %4 = vector.load %arg4[%c3, %c0_5] : memref<8x128xf32, #tpu.memory_space<vmem>>, vector<1x128xf32>
    %c4 = arith.constant 4 : index
    %c0_6 = arith.constant 0 : index
    %5 = vector.load %arg4[%c4, %c0_6] : memref<8x128xf32, #tpu.memory_space<vmem>>, vector<1x128xf32>
    %c0_7 = arith.constant 0 : index
    %c0_8 = arith.constant 0 : index
    %c0_9 = arith.constant 0 : index
    %6 = vector.load %arg3[%c0_7, %c0_8, %c0_9] : memref<2x32x32xf32, #tpu.memory_space<vmem>>, vector<1x32x32xf32>
    %7 = vector.shape_cast %6 : vector<1x32x32xf32> to vector<32x32xf32>
    %c1_10 = arith.constant 1 : index
    %c0_11 = arith.constant 0 : index
    %c0_12 = arith.constant 0 : index
    %8 = vector.load %arg3[%c1_10, %c0_11, %c0_12] : memref<2x32x32xf32, #tpu.memory_space<vmem>>, vector<1x32x32xf32>
    %9 = vector.shape_cast %8 : vector<1x32x32xf32> to vector<32x32xf32>
    %c0_13 = arith.constant 0 : index
    %c0_14 = arith.constant 0 : index
    %c0_15 = arith.constant 0 : index
    %10 = vector.load %arg2[%c0_13, %c0_14, %c0_15] : memref<9x128x128xf32, #tpu.memory_space<vmem>>, vector<1x128x128xf32>
    %11 = vector.shape_cast %10 : vector<1x128x128xf32> to vector<128x128xf32>
    %cst = arith.constant dense<0.000000e+00> : vector<32x128xf32>
    %12 = tpu.matmul %0, %11, %cst {dimension_numbers = #tpu.dot_dimension_numbers<[1], [0], [0], [1], [0, 0, 1, 1], [], []>} : vector<32x128xf32>, vector<128x128xf32>, vector<32x128xf32> -> vector<32x128xf32>
    %cst_16 = arith.constant dense<0.000000e+00> : vector<128xf32>
    %13 = vector.multi_reduction <add>, %12, %cst_16 [0] : vector<32x128xf32> to vector<128xf32>
    %14 = vector.shape_cast %13 : vector<128xf32> to vector<1x128xf32>
    %cst_17 = arith.constant 0.001953125 : f32
    %15 = vector.broadcast %cst_17 : f32 to vector<1x128xf32>
    %16 = arith.mulf %14, %15 : vector<1x128xf32>
    %17 = arith.mulf %0, %0 : vector<32x128xf32>
    %cst_18 = arith.constant dense<0.000000e+00> : vector<32x128xf32>
    %18 = tpu.matmul %17, %11, %cst_18 {dimension_numbers = #tpu.dot_dimension_numbers<[1], [0], [0], [1], [0, 0, 1, 1], [], []>} : vector<32x128xf32>, vector<128x128xf32>, vector<32x128xf32> -> vector<32x128xf32>
    %cst_19 = arith.constant dense<0.000000e+00> : vector<128xf32>
    %19 = vector.multi_reduction <add>, %18, %cst_19 [0] : vector<32x128xf32> to vector<128xf32>
    %20 = vector.shape_cast %19 : vector<128xf32> to vector<1x128xf32>
    %cst_20 = arith.constant 0.001953125 : f32
    %21 = vector.broadcast %cst_20 : f32 to vector<1x128xf32>
    %22 = arith.mulf %20, %21 : vector<1x128xf32>
    %23 = arith.mulf %16, %16 : vector<1x128xf32>
    %24 = arith.subf %22, %23 : vector<1x128xf32>
    %cst_21 = arith.constant 0.000000e+00 : f32
    %25 = vector.broadcast %cst_21 : f32 to vector<1x128xf32>
    %26 = arith.maximumf %24, %25 : vector<1x128xf32>
    %27 = vector.broadcast %16 : vector<1x128xf32> to vector<32x128xf32>
    %28 = arith.subf %0, %27 : vector<32x128xf32>
    %cst_22 = arith.constant 9.99999974E-6 : f32
    %29 = vector.broadcast %cst_22 : f32 to vector<1x128xf32>
    %30 = arith.addf %26, %29 : vector<1x128xf32>
    %31 = math.rsqrt %30 : vector<1x128xf32>
    %32 = vector.broadcast %31 : vector<1x128xf32> to vector<32x128xf32>
    %33 = arith.mulf %28, %32 : vector<32x128xf32>
    %34 = vector.broadcast %1 : vector<1x128xf32> to vector<32x128xf32>
    %35 = arith.mulf %33, %34 : vector<32x128xf32>
    %36 = vector.broadcast %2 : vector<1x128xf32> to vector<32x128xf32>
    %37 = arith.addf %35, %36 : vector<32x128xf32>
    %cst_23 = arith.constant 0.000000e+00 : f32
    %38 = vector.broadcast %cst_23 : f32 to vector<32x128xf32>
    %39 = arith.maximumf %37, %38 : vector<32x128xf32>
    %cst_24 = arith.constant dense<0.000000e+00> : vector<32x128xf32>
    %40 = tpu.matmul %7, %39, %cst_24 {dimension_numbers = #tpu.dot_dimension_numbers<[1], [0], [0], [1], [0, 0, 1, 1], [], []>} : vector<32x32xf32>, vector<32x128xf32>, vector<32x128xf32> -> vector<32x128xf32>
    %cst_25 = arith.constant dense<0.000000e+00> : vector<32x128xf32>
    %41 = tpu.matmul %9, %39, %cst_25 {dimension_numbers = #tpu.dot_dimension_numbers<[1], [0], [0], [1], [0, 0, 1, 1], [], []>} : vector<32x32xf32>, vector<32x128xf32>, vector<32x128xf32> -> vector<32x128xf32>
    %c3_26 = arith.constant 3 : index
    %c0_27 = arith.constant 0 : index
    %c0_28 = arith.constant 0 : index
    %42 = vector.load %arg2[%c3_26, %c0_27, %c0_28] : memref<9x128x128xf32, #tpu.memory_space<vmem>>, vector<1x128x128xf32>
    %43 = vector.shape_cast %42 : vector<1x128x128xf32> to vector<128x128xf32>
    %cst_29 = arith.constant dense<0.000000e+00> : vector<32x128xf32>
    %44 = tpu.matmul %40, %43, %cst_29 {dimension_numbers = #tpu.dot_dimension_numbers<[1], [0], [0], [1], [0, 0, 1, 1], [], []>} : vector<32x128xf32>, vector<128x128xf32>, vector<32x128xf32> -> vector<32x128xf32>
    %c4_30 = arith.constant 4 : index
    %c0_31 = arith.constant 0 : index
    %c0_32 = arith.constant 0 : index
    %45 = vector.load %arg2[%c4_30, %c0_31, %c0_32] : memref<9x128x128xf32, #tpu.memory_space<vmem>>, vector<1x128x128xf32>
    %46 = vector.shape_cast %45 : vector<1x128x128xf32> to vector<128x128xf32>
    %cst_33 = arith.constant dense<0.000000e+00> : vector<32x128xf32>
    %47 = tpu.matmul %39, %46, %cst_33 {dimension_numbers = #tpu.dot_dimension_numbers<[1], [0], [0], [1], [0, 0, 1, 1], [], []>} : vector<32x128xf32>, vector<128x128xf32>, vector<32x128xf32> -> vector<32x128xf32>
    %48 = arith.addf %44, %47 : vector<32x128xf32>
    %c5 = arith.constant 5 : index
    %c0_34 = arith.constant 0 : index
    %c0_35 = arith.constant 0 : index
    %49 = vector.load %arg2[%c5, %c0_34, %c0_35] : memref<9x128x128xf32, #tpu.memory_space<vmem>>, vector<1x128x128xf32>
    %50 = vector.shape_cast %49 : vector<1x128x128xf32> to vector<128x128xf32>
    %cst_36 = arith.constant dense<0.000000e+00> : vector<32x128xf32>
    %51 = tpu.matmul %41, %50, %cst_36 {dimension_numbers = #tpu.dot_dimension_numbers<[1], [0], [0], [1], [0, 0, 1, 1], [], []>} : vector<32x128xf32>, vector<128x128xf32>, vector<32x128xf32> -> vector<32x128xf32>
    %52 = arith.addf %48, %51 : vector<32x128xf32>
    %53 = vector.broadcast %3 : vector<1x128xf32> to vector<32x128xf32>
    %54 = arith.addf %52, %53 : vector<32x128xf32>
    %c1_37 = arith.constant 1 : index
    %c0_38 = arith.constant 0 : index
    %c0_39 = arith.constant 0 : index
    %55 = vector.load %arg2[%c1_37, %c0_38, %c0_39] : memref<9x128x128xf32, #tpu.memory_space<vmem>>, vector<1x128x128xf32>
    %56 = vector.shape_cast %55 : vector<1x128x128xf32> to vector<128x128xf32>
    %cst_40 = arith.constant dense<0.000000e+00> : vector<32x128xf32>
    %57 = tpu.matmul %54, %56, %cst_40 {dimension_numbers = #tpu.dot_dimension_numbers<[1], [0], [0], [1], [0, 0, 1, 1], [], []>} : vector<32x128xf32>, vector<128x128xf32>, vector<32x128xf32> -> vector<32x128xf32>
    %cst_41 = arith.constant dense<0.000000e+00> : vector<128xf32>
    %58 = vector.multi_reduction <add>, %57, %cst_41 [0] : vector<32x128xf32> to vector<128xf32>
    %59 = vector.shape_cast %58 : vector<128xf32> to vector<1x128xf32>
    %cst_42 = arith.constant 0.001953125 : f32
    %60 = vector.broadcast %cst_42 : f32 to vector<1x128xf32>
    %61 = arith.mulf %59, %60 : vector<1x128xf32>
    %62 = arith.mulf %54, %54 : vector<32x128xf32>
    %cst_43 = arith.constant dense<0.000000e+00> : vector<32x128xf32>
    %63 = tpu.matmul %62, %56, %cst_43 {dimension_numbers = #tpu.dot_dimension_numbers<[1], [0], [0], [1], [0, 0, 1, 1], [], []>} : vector<32x128xf32>, vector<128x128xf32>, vector<32x128xf32> -> vector<32x128xf32>
    %cst_44 = arith.constant dense<0.000000e+00> : vector<128xf32>
    %64 = vector.multi_reduction <add>, %63, %cst_44 [0] : vector<32x128xf32> to vector<128xf32>
    %65 = vector.shape_cast %64 : vector<128xf32> to vector<1x128xf32>
    %cst_45 = arith.constant 0.001953125 : f32
    %66 = vector.broadcast %cst_45 : f32 to vector<1x128xf32>
    %67 = arith.mulf %65, %66 : vector<1x128xf32>
    %68 = arith.mulf %61, %61 : vector<1x128xf32>
    %69 = arith.subf %67, %68 : vector<1x128xf32>
    %cst_46 = arith.constant 0.000000e+00 : f32
    %70 = vector.broadcast %cst_46 : f32 to vector<1x128xf32>
    %71 = arith.maximumf %69, %70 : vector<1x128xf32>
    %72 = vector.broadcast %61 : vector<1x128xf32> to vector<32x128xf32>
    %73 = arith.subf %54, %72 : vector<32x128xf32>
    %cst_47 = arith.constant 9.99999974E-6 : f32
    %74 = vector.broadcast %cst_47 : f32 to vector<1x128xf32>
    %75 = arith.addf %71, %74 : vector<1x128xf32>
    %76 = math.rsqrt %75 : vector<1x128xf32>
    %77 = vector.broadcast %76 : vector<1x128xf32> to vector<32x128xf32>
    %78 = arith.mulf %73, %77 : vector<32x128xf32>
    %79 = vector.broadcast %4 : vector<1x128xf32> to vector<32x128xf32>
    %80 = arith.mulf %78, %79 : vector<32x128xf32>
    %81 = vector.broadcast %5 : vector<1x128xf32> to vector<32x128xf32>
    %82 = arith.addf %80, %81 : vector<32x128xf32>
    %cst_48 = arith.constant 0.000000e+00 : f32
    %83 = vector.broadcast %cst_48 : f32 to vector<32x128xf32>
    %84 = arith.maximumf %82, %83 : vector<32x128xf32>
    %cst_49 = arith.constant dense<0.000000e+00> : vector<32x128xf32>
    %85 = tpu.matmul %7, %84, %cst_49 {dimension_numbers = #tpu.dot_dimension_numbers<[1], [0], [0], [1], [0, 0, 1, 1], [], []>} : vector<32x32xf32>, vector<32x128xf32>, vector<32x128xf32> -> vector<32x128xf32>
    %cst_50 = arith.constant dense<0.000000e+00> : vector<32x128xf32>
    %86 = tpu.matmul %9, %84, %cst_50 {dimension_numbers = #tpu.dot_dimension_numbers<[1], [0], [0], [1], [0, 0, 1, 1], [], []>} : vector<32x32xf32>, vector<32x128xf32>, vector<32x128xf32> -> vector<32x128xf32>
    %c6 = arith.constant 6 : index
    %c0_51 = arith.constant 0 : index
    %c0_52 = arith.constant 0 : index
    %87 = vector.load %arg2[%c6, %c0_51, %c0_52] : memref<9x128x128xf32, #tpu.memory_space<vmem>>, vector<1x128x128xf32>
    %88 = vector.shape_cast %87 : vector<1x128x128xf32> to vector<128x128xf32>
    %cst_53 = arith.constant dense<0.000000e+00> : vector<32x128xf32>
    %89 = tpu.matmul %85, %88, %cst_53 {dimension_numbers = #tpu.dot_dimension_numbers<[1], [0], [0], [1], [0, 0, 1, 1], [], []>} : vector<32x128xf32>, vector<128x128xf32>, vector<32x128xf32> -> vector<32x128xf32>
    %c7 = arith.constant 7 : index
    %c0_54 = arith.constant 0 : index
    %c0_55 = arith.constant 0 : index
    %90 = vector.load %arg2[%c7, %c0_54, %c0_55] : memref<9x128x128xf32, #tpu.memory_space<vmem>>, vector<1x128x128xf32>
    %91 = vector.shape_cast %90 : vector<1x128x128xf32> to vector<128x128xf32>
    %cst_56 = arith.constant dense<0.000000e+00> : vector<32x128xf32>
    %92 = tpu.matmul %84, %91, %cst_56 {dimension_numbers = #tpu.dot_dimension_numbers<[1], [0], [0], [1], [0, 0, 1, 1], [], []>} : vector<32x128xf32>, vector<128x128xf32>, vector<32x128xf32> -> vector<32x128xf32>
    %93 = arith.addf %89, %92 : vector<32x128xf32>
    %c8 = arith.constant 8 : index
    %c0_57 = arith.constant 0 : index
    %c0_58 = arith.constant 0 : index
    %94 = vector.load %arg2[%c8, %c0_57, %c0_58] : memref<9x128x128xf32, #tpu.memory_space<vmem>>, vector<1x128x128xf32>
    %95 = vector.shape_cast %94 : vector<1x128x128xf32> to vector<128x128xf32>
    %cst_59 = arith.constant dense<0.000000e+00> : vector<32x128xf32>
    %96 = tpu.matmul %86, %95, %cst_59 {dimension_numbers = #tpu.dot_dimension_numbers<[1], [0], [0], [1], [0, 0, 1, 1], [], []>} : vector<32x128xf32>, vector<128x128xf32>, vector<32x128xf32> -> vector<32x128xf32>
    %97 = arith.addf %93, %96 : vector<32x128xf32>
    %c2_60 = arith.constant 2 : index
    %c0_61 = arith.constant 0 : index
    %c0_62 = arith.constant 0 : index
    %98 = vector.load %arg2[%c2_60, %c0_61, %c0_62] : memref<9x128x128xf32, #tpu.memory_space<vmem>>, vector<1x128x128xf32>
    %99 = vector.shape_cast %98 : vector<1x128x128xf32> to vector<128x128xf32>
    %cst_63 = arith.constant dense<0.000000e+00> : vector<32x128xf32>
    %100 = tpu.matmul %39, %99, %cst_63 {dimension_numbers = #tpu.dot_dimension_numbers<[1], [0], [0], [1], [0, 0, 1, 1], [], []>} : vector<32x128xf32>, vector<128x128xf32>, vector<32x128xf32> -> vector<32x128xf32>
    %101 = arith.addf %97, %100 : vector<32x128xf32>
    %c0_64 = arith.constant 0 : index
    %c0_65 = arith.constant 0 : index
    %102 = vector.load %arg5[%c0_64, %c0_65] : memref<32x128xf32, #tpu.memory_space<vmem>>, vector<32x128xf32>
    tpu.vector_store %arg5[%c0_64, %c0_65], %101 {strides = array<i32>} : memref<32x128xf32, #tpu.memory_space<vmem>>, vector<32x128xf32>,
    return
  }
  func.func @transform_0(%arg0: i32) -> (i32, i32) {
    %c0_i32 = arith.constant 0 : i32
    %c0_i32_0 = arith.constant 0 : i32
    %c0_i32_1 = arith.constant 0 : i32
    return %c0_i32, %c0_i32_0 : i32, i32
  }
  func.func @transform_1(%arg0: i32) -> (i32, i32, i32) {
    %c0_i32 = arith.constant 0 : i32
    %c0_i32_0 = arith.constant 0 : i32
    %c0_i32_1 = arith.constant 0 : i32
    %c0_i32_2 = arith.constant 0 : i32
    return %c0_i32, %c0_i32_0, %c0_i32_1 : i32, i32, i32
  }
  func.func @transform_2(%arg0: i32) -> (i32, i32, i32) {
    %c0_i32 = arith.constant 0 : i32
    %c0_i32_0 = arith.constant 0 : i32
    %c0_i32_1 = arith.constant 0 : i32
    %c0_i32_2 = arith.constant 0 : i32
    return %c0_i32, %c0_i32_0, %c0_i32_1 : i32, i32, i32
  }
  func.func @transform_3(%arg0: i32) -> (i32, i32) {
    %c0_i32 = arith.constant 0 : i32
    %c0_i32_0 = arith.constant 0 : i32
    %c0_i32_1 = arith.constant 0 : i32
    return %c0_i32, %c0_i32_0 : i32, i32
  }
  func.func @transform_4(%arg0: i32) -> (i32, i32) {
    %c0_i32 = arith.constant 0 : i32
    %c0_i32_0 = arith.constant 0 : i32
    %c0_i32_1 = arith.constant 0 : i32
    return %c0_i32, %c0_i32_0 : i32, i32
  }
}

</mosaic_0001>

<llo_original>
// kernel: tpu_custom_call.1
$region0: #{tpu_custom_call.1}
  #allocation0 [shape = 'u32[]', space=smem, size = 0x4, offset = 0x4, fixed_abs, tag = 'smem constant byte address 0x4 - core index']
  #allocation1 [shape = 'u32[144,128]{1,0:T(1,128)}', space=vmem, size = 0x12000, scoped, tag = 'internal scratch']
  %s0 = inlined_call_operand.hbm [shape: f32[32,128], index: 0, kind: input, shape index: {}]
  %s1 = inlined_call_operand.hbm [shape: f32[9,128,128], index: 1, kind: input, shape index: {}]
  %s2 = inlined_call_operand.hbm [shape: f32[2,32,32], index: 2, kind: input, shape index: {}]
  %s3 = inlined_call_operand.vmem [shape: f32[8,128], index: 3, kind: input, shape index: {}]
  %s4 = inlined_call_operand.hbm [shape: f32[32,128], index: 4, kind: output, shape index: {}]
  %s5 = sld [smem:[#allocation0]]
  $region38: #{tpu_custom_call.1} parent=0
    _
  %s7 = ssub.s32 1, %s5
  %s8 = scalar_select 0, %s7, %s5
  $region1: #{tpu_custom_call.1} parent=0
    #allocation2 [shape = 'u8[16384]{0}', space=vmem, size = 0x4000, scoped, tag = 'input window, operand 0, single buffered']
    #allocation3 [shape = 's32[1]{0}', space=sflag, size = 0x4, scoped, tag = 'scoped memory for tpu_custom_call.1']
    #allocation4 [shape = 's32[1]{0}', space=sflag, size = 0x4, scoped, tag = 'scoped memory for tpu_custom_call.1']
    #allocation5 [shape = 'u8[589824]{0}', space=vmem, size = 0x90000, scoped, tag = 'input window, operand 1, single buffered']
    #allocation6 [shape = 's32[1]{0}', space=sflag, size = 0x4, scoped, tag = 'scoped memory for tpu_custom_call.1']
    #allocation7 [shape = 'u8[32768]{0}', space=vmem, size = 0x8000, scoped, tag = 'input window, operand 2, single buffered']
    #allocation8 [shape = 'u8[16384]{0}', space=vmem, size = 0x4000, scoped, tag = 'output window, operand 0, single buffered']
    %9 = vsyncpa [#allocation3], 0
    %10 = vsyncpa [#allocation6], 0
    %11 = vsyncpa [#allocation4], 0
    // Predicated region
    $region2: #{tpu_custom_call.1} parent=1 // pred_check
      _
    $region3: #{tpu_custom_call.1} parent=1 // pred_check_branch
      %13 = sbr.rel (0) target = $region5
    $region4: #{tpu_custom_call.1} parent=1 // pred_region
      %s15 = ssub.s32 512, 512
      %16 = vsyncadd [#allocation3], %s15
      %s17 = sshll.u32 [#allocation2], 4
      %s18 = int_to_ptr.vmem [resolvable:$true] %s17
      %23 = dma.hbm_to_vmem [thread:$0]  %s0, 512, %s18, [#allocation3], 128, 128, 8
    $region5: #{tpu_custom_call.1} parent=1 // pred_fallthru
      _
    // Predicated region
    $region6: #{tpu_custom_call.1} parent=1 // pred_check
      _
    $region7: #{tpu_custom_call.1} parent=1 // pred_check_branch
      %25 = sbr.rel (0) target = $region9
    $region8: #{tpu_custom_call.1} parent=1 // pred_region
      %s27 = ssub.s32 18432, 18432
      %28 = vsyncadd [#allocation6], %s27
      %s29 = sshll.u32 [#allocation5], 4
      %s30 = int_to_ptr.vmem [resolvable:$true] %s29
      %35 = dma.hbm_to_vmem [thread:$0]  %s1, 18432, %s30, [#allocation6], 128, 128, 8
    $region9: #{tpu_custom_call.1} parent=1 // pred_fallthru
      _
    // Predicated region
    $region10: #{tpu_custom_call.1} parent=1 // pred_check
      _
    $region11: #{tpu_custom_call.1} parent=1 // pred_check_branch
      %37 = sbr.rel (0) target = $region13
    $region12: #{tpu_custom_call.1} parent=1 // pred_region
      %s39 = ssub.s32 1024, 1024
      %40 = vsyncadd [#allocation6], %s39
      %s41 = sshll.u32 [#allocation7], 4
      %s42 = int_to_ptr.vmem [resolvable:$true] %s41
      %47 = dma.hbm_to_vmem [thread:$0]  %s2, 1024, %s42, [#allocation6], 128, 128, 8
    $region13: #{tpu_custom_call.1} parent=1 // pred_fallthru
      _
    // Predicated region
    $region14: #{tpu_custom_call.1} parent=1 // pred_check
      _
    $region15: #{tpu_custom_call.1} parent=1 // pred_check_branch
      %49 = sbr.rel (0) target = $region17
    $region16: #{tpu_custom_call.1} parent=1 // pred_region
      _
    $region17: #{tpu_custom_call.1} parent=1 // pred_fallthru
      _
    // Predicated region
    $region18: #{tpu_custom_call.1} parent=1 // pred_check
      _
    $region19: #{tpu_custom_call.1} parent=1 // pred_check_branch
      %51 = sbr.rel (0) target = $region21
    $region20: #{tpu_custom_call.1} parent=1 // pred_region
      %52 = dma.done [#allocation3], 512
    $region21: #{tpu_custom_call.1} parent=1 // pred_fallthru
      _
    // Predicated region
    $region22: #{tpu_custom_call.1} parent=1 // pred_check
      _
    $region23: #{tpu_custom_call.1} parent=1 // pred_check_branch
      %54 = sbr.rel (0) target = $region25
    $region24: #{tpu_custom_call.1} parent=1 // pred_region
      %55 = dma.done [#allocation6], 18432
    $region25: #{tpu_custom_call.1} parent=1 // pred_fallthru
      _
    // Predicated region
    $region26: #{tpu_custom_call.1} parent=1 // pred_check
      _
    $region27: #{tpu_custom_call.1} parent=1 // pred_check_branch
      %57 = sbr.rel (0) target = $region29
    $region28: #{tpu_custom_call.1} parent=1 // pred_region
      %58 = dma.done [#allocation6], 1024
    $region29: #{tpu_custom_call.1} parent=1 // pred_fallthru
      _
    %v59 = vld [vmem:[#allocation2] sm:$0xff]
    %v60 = vld [vmem:[#allocation2 + $0x8] sm:$0xff]
    %v61 = vld [vmem:[#allocation2 + $0x10] sm:$0xff]
    %v62 = vld [vmem:[#allocation2 + $0x18] sm:$0xff]
    %v63 = vld [vmem:[%s3] sm:$0x1]
    %v64 = vld [vmem:[%s3 + $0x1] sm:$0x1]
    %v65 = vld [vmem:[%s3 + $0x2] sm:$0x1]
    %v66 = vld [vmem:[%s3 + $0x3] sm:$0x1]
    %v67 = vld [vmem:[%s3 + $0x4] sm:$0x1]
    %v68 = vld [vmem:[#allocation7] sm:$0xff]
    %v69 = vld [vmem:[#allocation7 + $0x8] sm:$0xff]
    %v70 = vld [vmem:[#allocation7 + $0x10] sm:$0xff]
    %v71 = vld [vmem:[#allocation7 + $0x18] sm:$0xff]
    %s72 = scalar_lea.vmem [#allocation7], 32
    %v73 = vld [vmem:[%s72] sm:$0xff]
    %v74 = vld [vmem:[%s72 + $0x8] sm:$0xff]
    %v75 = vld [vmem:[%s72 + $0x10] sm:$0xff]
    %v76 = vld [vmem:[%s72 + $0x18] sm:$0xff]
    %v77 = vld [vmem:[#allocation5] sm:$0xff]
    %v78 = vld [vmem:[#allocation5 + $0x8] sm:$0xff]
    %v79 = vld [vmem:[#allocation5 + $0x10] sm:$0xff]
    %v80 = vld [vmem:[#allocation5 + $0x18] sm:$0xff]
    %v81 = vld [vmem:[#allocation5 + $0x20] sm:$0xff]
    %v82 = vld [vmem:[#allocation5 + $0x28] sm:$0xff]
    %v83 = vld [vmem:[#allocation5 + $0x30] sm:$0xff]
    %v84 = vld [vmem:[#allocation5 + $0x38] sm:$0xff]
    %v85 = vld [vmem:[#allocation5 + $0x40] sm:$0xff]
    %v86 = vld [vmem:[#allocation5 + $0x48] sm:$0xff]
    %v87 = vld [vmem:[#allocation5 + $0x50] sm:$0xff]
    %v88 = vld [vmem:[#allocation5 + $0x58] sm:$0xff]
    %v89 = vld [vmem:[#allocation5 + $0x60] sm:$0xff]
    %v90 = vld [vmem:[#allocation5 + $0x68] sm:$0xff]
    %v91 = vld [vmem:[#allocation5 + $0x70] sm:$0xff]
    %v92 = vld [vmem:[#allocation5 + $0x78] sm:$0xff]
    %93 = vmatprep.subr.mxu0 0.0
    %94 = vmatpush1.msra.mxu0 %v77
    %95 = vmatprep.subr.mxu0 0.0
    %96 = vmatpush1.msra.mxu0 %v78
    %97 = vmatprep.subr.mxu0 0.0
    %98 = vmatpush1.msra.mxu0 %v79
    %99 = vmatprep.subr.mxu0 0.0
    %100 = vmatpush1.msra.mxu0 %v80
    %101 = vmatprep.subr.mxu0 0.0
    %102 = vmatpush1.msra.mxu0 %v81
    %103 = vmatprep.subr.mxu0 0.0
    %104 = vmatpush1.msra.mxu0 %v82
    %105 = vmatprep.subr.mxu0 0.0
    %106 = vmatpush1.msra.mxu0 %v83
    %107 = vmatprep.subr.mxu0 0.0
    %108 = vmatpush1.msra.mxu0 %v84
    %109 = vmatprep.subr.mxu0 0.0
    %110 = vmatpush1.msra.mxu0 %v85
    %111 = vmatprep.subr.mxu0 0.0
    %112 = vmatpush1.msra.mxu0 %v86
    %113 = vmatprep.subr.mxu0 0.0
    %114 = vmatpush1.msra.mxu0 %v87
    %115 = vmatprep.subr.mxu0 0.0
    %116 = vmatpush1.msra.mxu0 %v88
    %117 = vmatprep.subr.mxu0 0.0
    %118 = vmatpush1.msra.mxu0 %v89
    %119 = vmatprep.subr.mxu0 0.0
    %120 = vmatpush1.msra.mxu0 %v90
    %121 = vmatprep.subr.mxu0 0.0
    %122 = vmatpush1.msra.mxu0 %v91
    %123 = vmatprep.subr.mxu0 0.0
    %124 = vmatpush1.msra.mxu0 %v92
    %125 = vmatprep.subr.mxu0 0.0
    %126 = vmatpush1.msra.mxu0 0.0
    %127 = vmatprep.subr.mxu0 0.0
    %128 = vmatpush1.msra.mxu0 0.0
    %129 = vmatprep.subr.mxu0 0.0
    %130 = vmatpush1.msra.mxu0 0.0
    %131 = vmatprep.subr.mxu0 0.0
    %132 = vmatpush1.msra.mxu0 0.0
    %133 = vmatprep.subr.mxu0 0.0
    %134 = vmatpush1.msra.mxu0 0.0
    %135 = vmatprep.subr.mxu0 0.0
    %136 = vmatpush1.msra.mxu0 0.0
    %137 = vmatprep.subr.mxu0 0.0
    %138 = vmatpush1.msra.mxu0 0.0
    %139 = vmatprep.subr.mxu0 0.0
    %140 = vmatpush1.msra.mxu0 0.0
    %141 = vmatprep.subr.mxu0 0.0
    %142 = vmatpush1.msra.mxu0 0.0
    %143 = vmatprep.subr.mxu0 0.0
    %144 = vmatpush1.msra.mxu0 0.0
    %145 = vmatprep.subr.mxu0 0.0
    %146 = vmatpush1.msra.mxu0 0.0
    %147 = vmatprep.subr.mxu0 0.0
    %148 = vmatpush1.msra.mxu0 0.0
    %149 = vmatprep.subr.mxu0 0.0
    %150 = vmatpush1.msra.mxu0 0.0
    %151 = vmatprep.subr.mxu0 0.0
    %152 = vmatpush1.msra.mxu0 0.0
    %153 = vmatprep.subr.mxu0 0.0
    %154 = vmatpush1.msra.mxu0 0.0
    %155 = vmatprep.subr.mxu0 0.0
    %156 = vmatpush1.msra.mxu0 0.0
    %157 = vmatprep.mubr.f32.mxu0 0.0
    %158 = vmatmul.mubr.f32.gmra.mrb[0].mxu0 %v59
    %v159 = vpop.f32.mrb[0].mxu0
    %v160 = vadd.f32 0.0, %v159
    %v161 = vpop.f32.mrb[0].mxu0
    %162 = vmatprep.mubr.f32.mxu0 0.0
    %163 = vmatmul.mubr.f32.gmra.mrb[0].mxu0 %v60
    %v164 = vpop.f32.mrb[0].mxu0
    %v165 = vadd.f32 0.0, %v164
    %v166 = vpop.f32.mrb[0].mxu0
    %167 = vmatprep.mubr.f32.mxu0 0.0
    %168 = vmatmul.mubr.f32.gmra.mrb[0].mxu0 %v61
    %v169 = vpop.f32.mrb[0].mxu0
    %v170 = vadd.f32 0.0, %v169
    %v171 = vpop.f32.mrb[0].mxu0
    %172 = vmatprep.mubr.f32.mxu0 0.0
    %173 = vmatmul.mubr.f32.gmra.mrb[0].mxu0 %v62
    %v174 = vpop.f32.mrb[0].mxu0
    %v175 = vadd.f32 0.0, %v174
    %v176 = vpop.f32.mrb[0].mxu0
    %177 = vdwg.mxu0
    %v178 = vadd.f32 %v160, %v165
    %v179 = vadd.f32 %v178, %v170
    %v180 = vadd.f32 %v179, %v175
    %v181 = vrot.slane %v180, 4
    %v182 = vadd.f32 %v180, %v181
    %v183 = vrot.slane %v182, 2
    %v184 = vadd.f32 %v182, %v183
    %v185 = vrot.slane %v184, 1
    %v186 = vadd.f32 %v184, %v185
    %v187 = vmul.f32 %v186, 0.001953125
    %v188 = vmul.f32 %v59, %v59
    %v189 = vmul.f32 %v60, %v60
    %v190 = vmul.f32 %v61, %v61
    %v191 = vmul.f32 %v62, %v62
    %192 = vmatprep.subr.mxu0 0.0
    %193 = vmatpush1.msra.mxu0 %v77
    %194 = vmatprep.subr.mxu0 0.0
    %195 = vmatpush1.msra.mxu0 %v78
    %196 = vmatprep.subr.mxu0 0.0
    %197 = vmatpush1.msra.mxu0 %v79
    %198 = vmatprep.subr.mxu0 0.0
    %199 = vmatpush1.msra.mxu0 %v80
    %200 = vmatprep.subr.mxu0 0.0
    %201 = vmatpush1.msra.mxu0 %v81
    %202 = vmatprep.subr.mxu0 0.0
    %203 = vmatpush1.msra.mxu0 %v82
    %204 = vmatprep.subr.mxu0 0.0
    %205 = vmatpush1.msra.mxu0 %v83
    %206 = vmatprep.subr.mxu0 0.0
    %207 = vmatpush1.msra.mxu0 %v84
    %208 = vmatprep.subr.mxu0 0.0
    %209 = vmatpush1.msra.mxu0 %v85
    %210 = vmatprep.subr.mxu0 0.0
    %211 = vmatpush1.msra.mxu0 %v86
    %212 = vmatprep.subr.mxu0 0.0
    %213 = vmatpush1.msra.mxu0 %v87
    %214 = vmatprep.subr.mxu0 0.0
    %215 = vmatpush1.msra.mxu0 %v88
    %216 = vmatprep.subr.mxu0 0.0
    %217 = vmatpush1.msra.mxu0 %v89
    %218 = vmatprep.subr.mxu0 0.0
    %219 = vmatpush1.msra.mxu0 %v90
    %220 = vmatprep.subr.mxu0 0.0
    %221 = vmatpush1.msra.mxu0 %v91
    %222 = vmatprep.subr.mxu0 0.0
    %223 = vmatpush1.msra.mxu0 %v92
    %224 = vmatprep.subr.mxu0 0.0
    %225 = vmatpush1.msra.mxu0 0.0
    %226 = vmatprep.subr.mxu0 0.0
    %227 = vmatpush1.msra.mxu0 0.0
    %228 = vmatprep.subr.mxu0 0.0
    %229 = vmatpush1.msra.mxu0 0.0
    %230 = vmatprep.subr.mxu0 0.0
    %231 = vmatpush1.msra.mxu0 0.0
    %232 = vmatprep.subr.mxu0 0.0
    %233 = vmatpush1.msra.mxu0 0.0
    %234 = vmatprep.subr.mxu0 0.0
    %235 = vmatpush1.msra.mxu0 0.0
    %236 = vmatprep.subr.mxu0 0.0
    %237 = vmatpush1.msra.mxu0 0.0
    %238 = vmatprep.subr.mxu0 0.0
    %239 = vmatpush1.msra.mxu0 0.0
    %240 = vmatprep.subr.mxu0 0.0
    %241 = vmatpush1.msra.mxu0 0.0
    %242 = vmatprep.subr.mxu0 0.0
    %243 = vmatpush1.msra.mxu0 0.0
    %244 = vmatprep.subr.mxu0 0.0
    %245 = vmatpush1.msra.mxu0 0.0
    %246 = vmatprep.subr.mxu0 0.0
    %247 = vmatpush1.msra.mxu0 0.0
    %248 = vmatprep.subr.mxu0 0.0
    %249 = vmatpush1.msra.mxu0 0.0
    %250 = vmatprep.subr.mxu0 0.0
    %251 = vmatpush1.msra.mxu0 0.0
    %252 = vmatprep.subr.mxu0 0.0
    %253 = vmatpush1.msra.mxu0 0.0
    %254 = vmatprep.subr.mxu0 0.0
    %255 = vmatpush1.msra.mxu0 0.0
    %256 = vmatprep.mubr.f32.mxu0 0.0
    %257 = vmatmul.mubr.f32.gmra.mrb[0].mxu0 %v188
    %v258 = vpop.f32.mrb[0].mxu0
    %v259 = vadd.f32 0.0, %v258
    %v260 = vpop.f32.mrb[0].mxu0
    %261 = vmatprep.mubr.f32.mxu0 0.0
    %262 = vmatmul.mubr.f32.gmra.mrb[0].mxu0 %v189
    %v263 = vpop.f32.mrb[0].mxu0
    %v264 = vadd.f32 0.0, %v263
    %v265 = vpop.f32.mrb[0].mxu0
    %266 = vmatprep.mubr.f32.mxu0 0.0
    %267 = vmatmul.mubr.f32.gmra.mrb[0].mxu0 %v190
    %v268 = vpop.f32.mrb[0].mxu0
    %v269 = vadd.f32 0.0, %v268
    %v270 = vpop.f32.mrb[0].mxu0
    %271 = vmatprep.mubr.f32.mxu0 0.0
    %272 = vmatmul.mubr.f32.gmra.mrb[0].mxu0 %v191
    %v273 = vpop.f32.mrb[0].mxu0
    %v274 = vadd.f32 0.0, %v273
    %v275 = vpop.f32.mrb[0].mxu0
    %276 = vdwg.mxu0
    %v277 = vadd.f32 %v259, %v264
    %v278 = vadd.f32 %v277, %v269
    %v279 = vadd.f32 %v278, %v274
    %v280 = vrot.slane %v279, 4
    %v281 = vadd.f32 %v279, %v280
    %v282 = vrot.slane %v281, 2
    %v283 = vadd.f32 %v281, %v282
    %v284 = vrot.slane %v283, 1
    %v285 = vadd.f32 %v283, %v284
    %v286 = vmul.f32 %v285, 0.001953125
    %v287 = vmul.f32 %v187, %v187
    %v288 = vsub.f32 %v286, %v287
    %v289 = vmax.f32 %v288, 0.0
    %v290 = vsub.f32 %v59, %v187
    %v291 = vsub.f32 %v60, %v187
    %v292 = vsub.f32 %v61, %v187
    %v293 = vsub.f32 %v62, %v187
    %v294 = vadd.f32 %v289, 1e-05
    %v295 = vrsqrt.pop %v294
    %v296 = vmul.f32 %v290, %v295
    %v297 = vmul.f32 %v291, %v295
    %v298 = vmul.f32 %v292, %v295
    %v299 = vmul.f32 %v293, %v295
    %v300 = vlaneseq
    %v301 = vshrl.u32 %v300, 7
    %v302 = vsub.s32 0, %v301
    %v303 = vrot.slane %v63, %v302
    %v304 = vmul.f32 %v296, %v303
    %v305 = vmul.f32 %v297, %v303
    %v306 = vmul.f32 %v298, %v303
    %v307 = vmul.f32 %v299, %v303
    %v308 = vlaneseq
    %v309 = vshrl.u32 %v308, 7
    %v310 = vsub.s32 0, %v309
    %v311 = vrot.slane %v64, %v310
    %v312 = vadd.f32 %v304, %v311
    %v313 = vadd.f32 %v305, %v311
    %v314 = vadd.f32 %v306, %v311
    %v315 = vadd.f32 %v307, %v311
    %v316 = vmax.f32 %v312, 0.0
    %v317 = vmax.f32 %v313, 0.0
    %v318 = vmax.f32 %v314, 0.0
    %v319 = vmax.f32 %v315, 0.0
    %vm320 = vcmask 261120
    %v322 = vsel %vm320, %v68, 0
    %v325 = vsel %vm320, %v69, 0
    %v328 = vsel %vm320, %v70, 0
    %v331 = vsel %vm320, %v71, 0
    %333 = vmatprep.subr.mxu0 0.0
    %334 = vmatpush1.msra.mxu0 %v316
    %335 = vmatprep.subr.mxu0 0.0
    %336 = vmatpush1.msra.mxu0 %v317
    %337 = vmatprep.subr.mxu0 0.0
    %338 = vmatpush1.msra.mxu0 %v318
    %339 = vmatprep.subr.mxu0 0.0
    %340 = vmatpush1.msra.mxu0 %v319
    %341 = vmatprep.subr.mxu0 0.0
    %342 = vmatpush1.msra.mxu0 0.0
    %343 = vmatprep.subr.mxu0 0.0
    %344 = vmatpush1.msra.mxu0 0.0
    %345 = vmatprep.subr.mxu0 0.0
    %346 = vmatpush1.msra.mxu0 0.0
    %347 = vmatprep.subr.mxu0 0.0
    %348 = vmatpush1.msra.mxu0 0.0
    %349 = vmatprep.subr.mxu0 0.0
    %350 = vmatpush1.msra.mxu0 0.0
    %351 = vmatprep.subr.mxu0 0.0
    %352 = vmatpush1.msra.mxu0 0.0
    %353 = vmatprep.subr.mxu0 0.0
    %354 = vmatpush1.msra.mxu0 0.0
    %355 = vmatprep.subr.mxu0 0.0
    %356 = vmatpush1.msra.mxu0 0.0
    %357 = vmatprep.subr.mxu0 0.0
    %358 = vmatpush1.msra.mxu0 0.0
    %359 = vmatprep.subr.mxu0 0.0
    %360 = vmatpush1.msra.mxu0 0.0
    %361 = vmatprep.subr.mxu0 0.0
    %362 = vmatpush1.msra.mxu0 0.0
    %363 = vmatprep.subr.mxu0 0.0
    %364 = vmatpush1.msra.mxu0 0.0
    %365 = vmatprep.subr.mxu0 0.0
    %366 = vmatpush1.msra.mxu0 0.0
    %367 = vmatprep.subr.mxu0 0.0
    %368 = vmatpush1.msra.mxu0 0.0
    %369 = vmatprep.subr.mxu0 0.0
    %370 = vmatpush1.msra.mxu0 0.0
    %371 = vmatprep.subr.mxu0 0.0
    %372 = vmatpush1.msra.mxu0 0.0
    %373 = vmatprep.subr.mxu0 0.0
    %374 = vmatpush1.msra.mxu0 0.0
    %375 = vmatprep.subr.mxu0 0.0
    %376 = vmatpush1.msra.mxu0 0.0
    %377 = vmatprep.subr.mxu0 0.0
    %378 = vmatpush1.msra.mxu0 0.0
    %379 = vmatprep.subr.mxu0 0.0
    %380 = vmatpush1.msra.mxu0 0.0
    %381 = vmatprep.subr.mxu0 0.0
    %382 = vmatpush1.msra.mxu0 0.0
    %383 = vmatprep.subr.mxu0 0.0
    %384 = vmatpush1.msra.mxu0 0.0
    %385 = vmatprep.subr.mxu0 0.0
    %386 = vmatpush1.msra.mxu0 0.0
    %387 = vmatprep.subr.mxu0 0.0
    %388 = vmatpush1.msra.mxu0 0.0
    %389 = vmatprep.subr.mxu0 0.0
    %390 = vmatpush1.msra.mxu0 0.0
    %391 = vmatprep.subr.mxu0 0.0
    %392 = vmatpush1.msra.mxu0 0.0
    %393 = vmatprep.subr.mxu0 0.0
    %394 = vmatpush1.msra.mxu0 0.0
    %395 = vmatprep.subr.mxu0 0.0
    %396 = vmatpush1.msra.mxu0 0.0
    %397 = vmatprep.mubr.f32.mxu0 0.0
    %398 = vmatmul.mubr.f32.gmra.mrb[0].mxu0 %v322
    %v399 = vpop.f32.mrb[0].mxu0
    %v400 = vadd.f32 0.0, %v399
    %v401 = vpop.f32.mrb[0].mxu0
    %402 = vmatprep.mubr.f32.mxu0 0.0
    %403 = vmatmul.mubr.f32.gmra.mrb[0].mxu0 %v325
    %v404 = vpop.f32.mrb[0].mxu0
    %v405 = vadd.f32 0.0, %v404
    %v406 = vpop.f32.mrb[0].mxu0
    %407 = vmatprep.mubr.f32.mxu0 0.0
    %408 = vmatmul.mubr.f32.gmra.mrb[0].mxu0 %v328
    %v409 = vpop.f32.mrb[0].mxu0
    %v410 = vadd.f32 0.0, %v409
    %v411 = vpop.f32.mrb[0].mxu0
    %412 = vmatprep.mubr.f32.mxu0 0.0
    %413 = vmatmul.mubr.f32.gmra.mrb[0].mxu0 %v331
    %v414 = vpop.f32.mrb[0].mxu0
    %v415 = vadd.f32 0.0, %v414
    %v416 = vpop.f32.mrb[0].mxu0
    %417 = vdwg.mxu0
    %v419 = vsel %vm320, %v73, 0
    %v422 = vsel %vm320, %v74, 0
    %v425 = vsel %vm320, %v75, 0
    %v428 = vsel %vm320, %v76, 0
    %430 = vmatprep.subr.mxu0 0.0
    %431 = vmatpush1.msra.mxu0 %v316
    %432 = vmatprep.subr.mxu0 0.0
    %433 = vmatpush1.msra.mxu0 %v317
    %434 = vmatprep.subr.mxu0 0.0
    %435 = vmatpush1.msra.mxu0 %v318
    %436 = vmatprep.subr.mxu0 0.0
    %437 = vmatpush1.msra.mxu0 %v319
    %438 = vmatprep.subr.mxu0 0.0
    %439 = vmatpush1.msra.mxu0 0.0
    %440 = vmatprep.subr.mxu0 0.0
    %441 = vmatpush1.msra.mxu0 0.0
    %442 = vmatprep.subr.mxu0 0.0
    %443 = vmatpush1.msra.mxu0 0.0
    %444 = vmatprep.subr.mxu0 0.0
    %445 = vmatpush1.msra.mxu0 0.0
    %446 = vmatprep.subr.mxu0 0.0
    %447 = vmatpush1.msra.mxu0 0.0
    %448 = vmatprep.subr.mxu0 0.0
    %449 = vmatpush1.msra.mxu0 0.0
    %450 = vmatprep.subr.mxu0 0.0
    %451 = vmatpush1.msra.mxu0 0.0
    %452 = vmatprep.subr.mxu0 0.0
    %453 = vmatpush1.msra.mxu0 0.0
    %454 = vmatprep.subr.mxu0 0.0
    %455 = vmatpush1.msra.mxu0 0.0
    %456 = vmatprep.subr.mxu0 0.0
    %457 = vmatpush1.msra.mxu0 0.0
    %458 = vmatprep.subr.mxu0 0.0
    %459 = vmatpush1.msra.mxu0 0.0
    %460 = vmatprep.subr.mxu0 0.0
    %461 = vmatpush1.msra.mxu0 0.0
    %462 = vmatprep.subr.mxu0 0.0
    %463 = vmatpush1.msra.mxu0 0.0
    %464 = vmatprep.subr.mxu0 0.0
    %465 = vmatpush1.msra.mxu0 0.0
    %466 = vmatprep.subr.mxu0 0.0
    %467 = vmatpush1.msra.mxu0 0.0
    %468 = vmatprep.subr.mxu0 0.0
    %469 = vmatpush1.msra.mxu0 0.0
    %470 = vmatprep.subr.mxu0 0.0
    %471 = vmatpush1.msra.mxu0 0.0
    %472 = vmatprep.subr.mxu0 0.0
    %473 = vmatpush1.msra.mxu0 0.0
    %474 = vmatprep.subr.mxu0 0.0
    %475 = vmatpush1.msra.mxu0 0.0
    %476 = vmatprep.subr.mxu0 0.0
    %477 = vmatpush1.msra.mxu0 0.0
    %478 = vmatprep.subr.mxu0 0.0
    %479 = vmatpush1.msra.mxu0 0.0
    %480 = vmatprep.subr.mxu0 0.0
    %481 = vmatpush1.msra.mxu0 0.0
    %482 = vmatprep.subr.mxu0 0.0
    %483 = vmatpush1.msra.mxu0 0.0
    %484 = vmatprep.subr.mxu0 0.0
    %485 = vmatpush1.msra.mxu0 0.0
    %486 = vmatprep.subr.mxu0 0.0
    %487 = vmatpush1.msra.mxu0 0.0
    %488 = vmatprep.subr.mxu0 0.0
    %489 = vmatpush1.msra.mxu0 0.0
    %490 = vmatprep.subr.mxu0 0.0
    %491 = vmatpush1.msra.mxu0 0.0
    %492 = vmatprep.subr.mxu0 0.0
    %493 = vmatpush1.msra.mxu0 0.0
    %494 = vmatprep.mubr.f32.mxu0 0.0
    %495 = vmatmul.mubr.f32.gmra.mrb[0].mxu0 %v419
    %v496 = vpop.f32.mrb[0].mxu0
    %v497 = vadd.f32 0.0, %v496
    %v498 = vpop.f32.mrb[0].mxu0
    %499 = vmatprep.mubr.f32.mxu0 0.0
    %500 = vmatmul.mubr.f32.gmra.mrb[0].mxu0 %v422
    %v501 = vpop.f32.mrb[0].mxu0
    %v502 = vadd.f32 0.0, %v501
    %v503 = vpop.f32.mrb[0].mxu0
    %504 = vmatprep.mubr.f32.mxu0 0.0
    %505 = vmatmul.mubr.f32.gmra.mrb[0].mxu0 %v425
    %v506 = vpop.f32.mrb[0].mxu0
    %v507 = vadd.f32 0.0, %v506
    %v508 = vpop.f32.mrb[0].mxu0
    %509 = vmatprep.mubr.f32.mxu0 0.0
    %510 = vmatmul.mubr.f32.gmra.mrb[0].mxu0 %v428
    %v511 = vpop.f32.mrb[0].mxu0
    %v512 = vadd.f32 0.0, %v511
    %v513 = vpop.f32.mrb[0].mxu0
    %514 = vdwg.mxu0
    %s515 = scalar_lea.vmem [#allocation5], 384
    %v516 = vld [vmem:[%s515] sm:$0xff]
    %v517 = vld [vmem:[%s515 + $0x8] sm:$0xff]
    %v518 = vld [vmem:[%s515 + $0x10] sm:$0xff]
    %v519 = vld [vmem:[%s515 + $0x18] sm:$0xff]
    %v520 = vld [vmem:[%s515 + $0x20] sm:$0xff]
    %v521 = vld [vmem:[%s515 + $0x28] sm:$0xff]
    %v522 = vld [vmem:[%s515 + $0x30] sm:$0xff]
    %v523 = vld [vmem:[%s515 + $0x38] sm:$0xff]
    %v524 = vld [vmem:[%s515 + $0x40] sm:$0xff]
    %v525 = vld [vmem:[%s515 + $0x48] sm:$0xff]
    %v526 = vld [vmem:[%s515 + $0x50] sm:$0xff]
    %v527 = vld [vmem:[%s515 + $0x58] sm:$0xff]
    %v528 = vld [vmem:[%s515 + $0x60] sm:$0xff]
    %v529 = vld [vmem:[%s515 + $0x68] sm:$0xff]
    %v530 = vld [vmem:[%s515 + $0x70] sm:$0xff]
    %v531 = vld [vmem:[%s515 + $0x78] sm:$0xff]
    %s532 = scalar_lea.vmem [#allocation5], 512
    %v533 = vld [vmem:[%s532] sm:$0xff]
    %v534 = vld [vmem:[%s532 + $0x8] sm:$0xff]
    %v535 = vld [vmem:[%s532 + $0x10] sm:$0xff]
    %v536 = vld [vmem:[%s532 + $0x18] sm:$0xff]
    %v537 = vld [vmem:[%s532 + $0x20] sm:$0xff]
    %v538 = vld [vmem:[%s532 + $0x28] sm:$0xff]
    %v539 = vld [vmem:[%s532 + $0x30] sm:$0xff]
    %v540 = vld [vmem:[%s532 + $0x38] sm:$0xff]
    %v541 = vld [vmem:[%s532 + $0x40] sm:$0xff]
    %v542 = vld [vmem:[%s532 + $0x48] sm:$0xff]
    %v543 = vld [vmem:[%s532 + $0x50] sm:$0xff]
    %v544 = vld [vmem:[%s532 + $0x58] sm:$0xff]
    %v545 = vld [vmem:[%s532 + $0x60] sm:$0xff]
    %v546 = vld [vmem:[%s532 + $0x68] sm:$0xff]
    %v547 = vld [vmem:[%s532 + $0x70] sm:$0xff]
    %v548 = vld [vmem:[%s532 + $0x78] sm:$0xff]
    %549 = vmatprep.subr.mxu0 0.0
    %550 = vmatpush1.msra.mxu0 %v533
    %551 = vmatprep.subr.mxu0 0.0
    %552 = vmatpush1.msra.mxu0 %v534
    %553 = vmatprep.subr.mxu0 0.0
    %554 = vmatpush1.msra.mxu0 %v535
    %555 = vmatprep.subr.mxu0 0.0
    %556 = vmatpush1.msra.mxu0 %v536
    %557 = vmatprep.subr.mxu0 0.0
    %558 = vmatpush1.msra.mxu0 %v537
    %559 = vmatprep.subr.mxu0 0.0
    %560 = vmatpush1.msra.mxu0 %v538
    %561 = vmatprep.subr.mxu0 0.0
    %562 = vmatpush1.msra.mxu0 %v539
    %563 = vmatprep.subr.mxu0 0.0
    %564 = vmatpush1.msra.mxu0 %v540
    %565 = vmatprep.subr.mxu0 0.0
    %566 = vmatpush1.msra.mxu0 %v541
    %567 = vmatprep.subr.mxu0 0.0
    %568 = vmatpush1.msra.mxu0 %v542
    %569 = vmatprep.subr.mxu0 0.0
    %570 = vmatpush1.msra.mxu0 %v543
    %571 = vmatprep.subr.mxu0 0.0
    %572 = vmatpush1.msra.mxu0 %v544
    %573 = vmatprep.subr.mxu0 0.0
    %574 = vmatpush1.msra.mxu0 %v545
    %575 = vmatprep.subr.mxu0 0.0
    %576 = vmatpush1.msra.mxu0 %v546
    %577 = vmatprep.subr.mxu0 0.0
    %578 = vmatpush1.msra.mxu0 %v547
    %579 = vmatprep.subr.mxu0 0.0
    %580 = vmatpush1.msra.mxu0 %v548
    %581 = vmatprep.subr.mxu0 0.0
    %582 = vmatpush1.msra.mxu0 0.0
    %583 = vmatprep.subr.mxu0 0.0
    %584 = vmatpush1.msra.mxu0 0.0
    %585 = vmatprep.subr.mxu0 0.0
    %586 = vmatpush1.msra.mxu0 0.0
    %587 = vmatprep.subr.mxu0 0.0
    %588 = vmatpush1.msra.mxu0 0.0
    %589 = vmatprep.subr.mxu0 0.0
    %590 = vmatpush1.msra.mxu0 0.0
    %591 = vmatprep.subr.mxu0 0.0
    %592 = vmatpush1.msra.mxu0 0.0
    %593 = vmatprep.subr.mxu0 0.0
    %594 = vmatpush1.msra.mxu0 0.0
    %595 = vmatprep.subr.mxu0 0.0
    %596 = vmatpush1.msra.mxu0 0.0
    %597 = vmatprep.subr.mxu0 0.0
    %598 = vmatpush1.msra.mxu0 0.0
    %599 = vmatprep.subr.mxu0 0.0
    %600 = vmatpush1.msra.mxu0 0.0
    %601 = vmatprep.subr.mxu0 0.0
    %602 = vmatpush1.msra.mxu0 0.0
    %603 = vmatprep.subr.mxu0 0.0
    %604 = vmatpush1.msra.mxu0 0.0
    %605 = vmatprep.subr.mxu0 0.0
    %606 = vmatpush1.msra.mxu0 0.0
    %607 = vmatprep.subr.mxu0 0.0
    %608 = vmatpush1.msra.mxu0 0.0
    %609 = vmatprep.subr.mxu0 0.0
    %610 = vmatpush1.msra.mxu0 0.0
    %611 = vmatprep.subr.mxu0 0.0
    %612 = vmatpush1.msra.mxu0 0.0
    %613 = vmatprep.mubr.f32.mxu0 0.0
    %614 = vmatmul.mubr.f32.gmra.mrb[0].mxu0 %v316
    %v615 = vpop.f32.mrb[0].mxu0
    %v616 = vadd.f32 0.0, %v615
    %v617 = vpop.f32.mrb[0].mxu0
    %618 = vmatprep.mubr.f32.mxu0 0.0
    %619 = vmatmul.mubr.f32.gmra.mrb[0].mxu0 %v317
    %v620 = vpop.f32.mrb[0].mxu0
    %v621 = vadd.f32 0.0, %v620
    %v622 = vpop.f32.mrb[0].mxu0
    %623 = vmatprep.mubr.f32.mxu0 0.0
    %624 = vmatmul.mubr.f32.gmra.mrb[0].mxu0 %v318
    %v625 = vpop.f32.mrb[0].mxu0
    %v626 = vadd.f32 0.0, %v625
    %v627 = vpop.f32.mrb[0].mxu0
    %628 = vmatprep.mubr.f32.mxu0 0.0
    %629 = vmatmul.mubr.f32.gmra.mrb[0].mxu0 %v319
    %v630 = vpop.f32.mrb[0].mxu0
    %v631 = vadd.f32 0.0, %v630
    %v632 = vpop.f32.mrb[0].mxu0
    %633 = vdwg.mxu0
    %634 = vmatprep.subr.mxu0 0.0
    %635 = vmatpush1.msra.mxu0 %v516
    %636 = vmatprep.subr.mxu0 0.0
    %637 = vmatpush1.msra.mxu0 %v517
    %638 = vmatprep.subr.mxu0 0.0
    %639 = vmatpush1.msra.mxu0 %v518
    %640 = vmatprep.subr.mxu0 0.0
    %641 = vmatpush1.msra.mxu0 %v519
    %642 = vmatprep.subr.mxu0 0.0
    %643 = vmatpush1.msra.mxu0 %v520
    %644 = vmatprep.subr.mxu0 0.0
    %645 = vmatpush1.msra.mxu0 %v521
    %646 = vmatprep.subr.mxu0 0.0
    %647 = vmatpush1.msra.mxu0 %v522
    %648 = vmatprep.subr.mxu0 0.0
    %649 = vmatpush1.msra.mxu0 %v523
    %650 = vmatprep.subr.mxu0 0.0
    %651 = vmatpush1.msra.mxu0 %v524
    %652 = vmatprep.subr.mxu0 0.0
    %653 = vmatpush1.msra.mxu0 %v525
    %654 = vmatprep.subr.mxu0 0.0
    %655 = vmatpush1.msra.mxu0 %v526
    %656 = vmatprep.subr.mxu0 0.0
    %657 = vmatpush1.msra.mxu0 %v527
    %658 = vmatprep.subr.mxu0 0.0
    %659 = vmatpush1.msra.mxu0 %v528
    %660 = vmatprep.subr.mxu0 0.0
    %661 = vmatpush1.msra.mxu0 %v529
    %662 = vmatprep.subr.mxu0 0.0
    %663 = vmatpush1.msra.mxu0 %v530
    %664 = vmatprep.subr.mxu0 0.0
    %665 = vmatpush1.msra.mxu0 %v531
    %666 = vmatprep.subr.mxu0 0.0
    %667 = vmatpush1.msra.mxu0 0.0
    %668 = vmatprep.subr.mxu0 0.0
    %669 = vmatpush1.msra.mxu0 0.0
    %670 = vmatprep.subr.mxu0 0.0
    %671 = vmatpush1.msra.mxu0 0.0
    %672 = vmatprep.subr.mxu0 0.0
    %673 = vmatpush1.msra.mxu0 0.0
    %674 = vmatprep.subr.mxu0 0.0
    %675 = vmatpush1.msra.mxu0 0.0
    %676 = vmatprep.subr.mxu0 0.0
    %677 = vmatpush1.msra.mxu0 0.0
    %678 = vmatprep.subr.mxu0 0.0
    %679 = vmatpush1.msra.mxu0 0.0
    %680 = vmatprep.subr.mxu0 0.0
    %681 = vmatpush1.msra.mxu0 0.0
    %682 = vmatprep.subr.mxu0 0.0
    %683 = vmatpush1.msra.mxu0 0.0
    %684 = vmatprep.subr.mxu0 0.0
    %685 = vmatpush1.msra.mxu0 0.0
    %686 = vmatprep.subr.mxu0 0.0
    %687 = vmatpush1.msra.mxu0 0.0
    %688 = vmatprep.subr.mxu0 0.0
    %689 = vmatpush1.msra.mxu0 0.0
    %690 = vmatprep.subr.mxu0 0.0
    %691 = vmatpush1.msra.mxu0 0.0
    %692 = vmatprep.subr.mxu0 0.0
    %693 = vmatpush1.msra.mxu0 0.0
    %694 = vmatprep.subr.mxu0 0.0
    %695 = vmatpush1.msra.mxu0 0.0
    %696 = vmatprep.subr.mxu0 0.0
    %697 = vmatpush1.msra.mxu0 0.0
    %698 = vmatprep.mubr.f32.mxu0 0.0
    %699 = vmatmul.mubr.f32.gmra.mrb[0].mxu0 %v400
    %v700 = vpop.f32.mrb[0].mxu0
    %v701 = vadd.f32 %v616, %v700
    %v702 = vpop.f32.mrb[0].mxu0
    %703 = vmatprep.mubr.f32.mxu0 0.0
    %704 = vmatmul.mubr.f32.gmra.mrb[0].mxu0 %v405
    %v705 = vpop.f32.mrb[0].mxu0
    %v706 = vadd.f32 %v621, %v705
    %v707 = vpop.f32.mrb[0].mxu0
    %708 = vmatprep.mubr.f32.mxu0 0.0
    %709 = vmatmul.mubr.f32.gmra.mrb[0].mxu0 %v410
    %v710 = vpop.f32.mrb[0].mxu0
    %v711 = vadd.f32 %v626, %v710
    %v712 = vpop.f32.mrb[0].mxu0
    %713 = vmatprep.mubr.f32.mxu0 0.0
    %714 = vmatmul.mubr.f32.gmra.mrb[0].mxu0 %v415
    %v715 = vpop.f32.mrb[0].mxu0
    %v716 = vadd.f32 %v631, %v715
    %v717 = vpop.f32.mrb[0].mxu0
    %718 = vdwg.mxu0
    %s719 = scalar_lea.vmem [#allocation5], 640
    %v720 = vld [vmem:[%s719] sm:$0xff]
    %v721 = vld [vmem:[%s719 + $0x8] sm:$0xff]
    %v722 = vld [vmem:[%s719 + $0x10] sm:$0xff]
    %v723 = vld [vmem:[%s719 + $0x18] sm:$0xff]
    %v724 = vld [vmem:[%s719 + $0x20] sm:$0xff]
    %v725 = vld [vmem:[%s719 + $0x28] sm:$0xff]
    %v726 = vld [vmem:[%s719 + $0x30] sm:$0xff]
    %v727 = vld [vmem:[%s719 + $0x38] sm:$0xff]
    %v728 = vld [vmem:[%s719 + $0x40] sm:$0xff]
    %v729 = vld [vmem:[%s719 + $0x48] sm:$0xff]
    %v730 = vld [vmem:[%s719 + $0x50] sm:$0xff]
    %v731 = vld [vmem:[%s719 + $0x58] sm:$0xff]
    %v732 = vld [vmem:[%s719 + $0x60] sm:$0xff]
    %v733 = vld [vmem:[%s719 + $0x68] sm:$0xff]
    %v734 = vld [vmem:[%s719 + $0x70] sm:$0xff]
    %v735 = vld [vmem:[%s719 + $0x78] sm:$0xff]
    %736 = vmatprep.subr.mxu0 0.0
    %737 = vmatpush1.msra.mxu0 %v720
    %738 = vmatprep.subr.mxu0 0.0
    %739 = vmatpush1.msra.mxu0 %v721
    %740 = vmatprep.subr.mxu0 0.0
    %741 = vmatpush1.msra.mxu0 %v722
    %742 = vmatprep.subr.mxu0 0.0
    %743 = vmatpush1.msra.mxu0 %v723
    %744 = vmatprep.subr.mxu0 0.0
    %745 = vmatpush1.msra.mxu0 %v724
    %746 = vmatprep.subr.mxu0 0.0
    %747 = vmatpush1.msra.mxu0 %v725
    %748 = vmatprep.subr.mxu0 0.0
    %749 = vmatpush1.msra.mxu0 %v726
    %750 = vmatprep.subr.mxu0 0.0
    %751 = vmatpush1.msra.mxu0 %v727
    %752 = vmatprep.subr.mxu0 0.0
    %753 = vmatpush1.msra.mxu0 %v728
    %754 = vmatprep.subr.mxu0 0.0
    %755 = vmatpush1.msra.mxu0 %v729
    %756 = vmatprep.subr.mxu0 0.0
    %757 = vmatpush1.msra.mxu0 %v730
    %758 = vmatprep.subr.mxu0 0.0
    %759 = vmatpush1.msra.mxu0 %v731
    %760 = vmatprep.subr.mxu0 0.0
    %761 = vmatpush1.msra.mxu0 %v732
    %762 = vmatprep.subr.mxu0 0.0
    %763 = vmatpush1.msra.mxu0 %v733
    %764 = vmatprep.subr.mxu0 0.0
    %765 = vmatpush1.msra.mxu0 %v734
    %766 = vmatprep.subr.mxu0 0.0
    %767 = vmatpush1.msra.mxu0 %v735
    %768 = vmatprep.subr.mxu0 0.0
    %769 = vmatpush1.msra.mxu0 0.0
    %770 = vmatprep.subr.mxu0 0.0
    %771 = vmatpush1.msra.mxu0 0.0
    %772 = vmatprep.subr.mxu0 0.0
    %773 = vmatpush1.msra.mxu0 0.0
    %774 = vmatprep.subr.mxu0 0.0
    %775 = vmatpush1.msra.mxu0 0.0
    %776 = vmatprep.subr.mxu0 0.0
    %777 = vmatpush1.msra.mxu0 0.0
    %778 = vmatprep.subr.mxu0 0.0
    %779 = vmatpush1.msra.mxu0 0.0
    %780 = vmatprep.subr.mxu0 0.0
    %781 = vmatpush1.msra.mxu0 0.0
    %782 = vmatprep.subr.mxu0 0.0
    %783 = vmatpush1.msra.mxu0 0.0
    %784 = vmatprep.subr.mxu0 0.0
    %785 = vmatpush1.msra.mxu0 0.0
    %786 = vmatprep.subr.mxu0 0.0
    %787 = vmatpush1.msra.mxu0 0.0
    %788 = vmatprep.subr.mxu0 0.0
    %789 = vmatpush1.msra.mxu0 0.0
    %790 = vmatprep.subr.mxu0 0.0
    %791 = vmatpush1.msra.mxu0 0.0
    %792 = vmatprep.subr.mxu0 0.0
    %793 = vmatpush1.msra.mxu0 0.0
    %794 = vmatprep.subr.mxu0 0.0
    %795 = vmatpush1.msra.mxu0 0.0
    %796 = vmatprep.subr.mxu0 0.0
    %797 = vmatpush1.msra.mxu0 0.0
    %798 = vmatprep.subr.mxu0 0.0
    %799 = vmatpush1.msra.mxu0 0.0
    %800 = vmatprep.mubr.f32.mxu0 0.0
    %801 = vmatmul.mubr.f32.gmra.mrb[0].mxu0 %v497
    %v802 = vpop.f32.mrb[0].mxu0
    %v803 = vadd.f32 0.0, %v802
    %v804 = vpop.f32.mrb[0].mxu0
    %805 = vmatprep.mubr.f32.mxu0 0.0
    %806 = vmatmul.mubr.f32.gmra.mrb[0].mxu0 %v502
    %v807 = vpop.f32.mrb[0].mxu0
    %v808 = vadd.f32 0.0, %v807
    %v809 = vpop.f32.mrb[0].mxu0
    %810 = vmatprep.mubr.f32.mxu0 0.0
    %811 = vmatmul.mubr.f32.gmra.mrb[0].mxu0 %v507
    %v812 = vpop.f32.mrb[0].mxu0
    %v813 = vadd.f32 0.0, %v812
    %v814 = vpop.f32.mrb[0].mxu0
    %815 = vmatprep.mubr.f32.mxu0 0.0
    %816 = vmatmul.mubr.f32.gmra.mrb[0].mxu0 %v512
    %v817 = vpop.f32.mrb[0].mxu0
    %v818 = vadd.f32 0.0, %v817
    %v819 = vpop.f32.mrb[0].mxu0
    %820 = vdwg.mxu0
    %v821 = vadd.f32 %v701, %v803
    %v822 = vadd.f32 %v706, %v808
    %v823 = vadd.f32 %v711, %v813
    %v824 = vadd.f32 %v716, %v818
    %v825 = vlaneseq
    %v826 = vshrl.u32 %v825, 7
    %v827 = vsub.s32 0, %v826
    %v828 = vrot.slane %v65, %v827
    %v829 = vadd.f32 %v821, %v828
    %v830 = vadd.f32 %v822, %v828
    %v831 = vadd.f32 %v823, %v828
    %v832 = vadd.f32 %v824, %v828
    %s833 = scalar_lea.vmem [#allocation5], 128
    %v834 = vld [vmem:[%s833] sm:$0xff]
    %v835 = vld [vmem:[%s833 + $0x8] sm:$0xff]
    %v836 = vld [vmem:[%s833 + $0x10] sm:$0xff]
    %v837 = vld [vmem:[%s833 + $0x18] sm:$0xff]
    %v838 = vld [vmem:[%s833 + $0x20] sm:$0xff]
    %v839 = vld [vmem:[%s833 + $0x28] sm:$0xff]
    %v840 = vld [vmem:[%s833 + $0x30] sm:$0xff]
    %v841 = vld [vmem:[%s833 + $0x38] sm:$0xff]
    %v842 = vld [vmem:[%s833 + $0x40] sm:$0xff]
    %v843 = vld [vmem:[%s833 + $0x48] sm:$0xff]
    %v844 = vld [vmem:[%s833 + $0x50] sm:$0xff]
    %v845 = vld [vmem:[%s833 + $0x58] sm:$0xff]
    %v846 = vld [vmem:[%s833 + $0x60] sm:$0xff]
    %v847 = vld [vmem:[%s833 + $0x68] sm:$0xff]
    %v848 = vld [vmem:[%s833 + $0x70] sm:$0xff]
    %v849 = vld [vmem:[%s833 + $0x78] sm:$0xff]
    %850 = vmatprep.subr.mxu0 0.0
    %851 = vmatpush1.msra.mxu0 %v834
    %852 = vmatprep.subr.mxu0 0.0
    %853 = vmatpush1.msra.mxu0 %v835
    %854 = vmatprep.subr.mxu0 0.0
    %855 = vmatpush1.msra.mxu0 %v836
    %856 = vmatprep.subr.mxu0 0.0
    %857 = vmatpush1.msra.mxu0 %v837
    %858 = vmatprep.subr.mxu0 0.0
    %859 = vmatpush1.msra.mxu0 %v838
    %860 = vmatprep.subr.mxu0 0.0
    %861 = vmatpush1.msra.mxu0 %v839
    %862 = vmatprep.subr.mxu0 0.0
    %863 = vmatpush1.msra.mxu0 %v840
    %864 = vmatprep.subr.mxu0 0.0
    %865 = vmatpush1.msra.mxu0 %v841
    %866 = vmatprep.subr.mxu0 0.0
    %867 = vmatpush1.msra.mxu0 %v842
    %868 = vmatprep.subr.mxu0 0.0
    %869 = vmatpush1.msra.mxu0 %v843
    %870 = vmatprep.subr.mxu0 0.0
    %871 = vmatpush1.msra.mxu0 %v844
    %872 = vmatprep.subr.mxu0 0.0
    %873 = vmatpush1.msra.mxu0 %v845
    %874 = vmatprep.subr.mxu0 0.0
    %875 = vmatpush1.msra.mxu0 %v846
    %876 = vmatprep.subr.mxu0 0.0
    %877 = vmatpush1.msra.mxu0 %v847
    %878 = vmatprep.subr.mxu0 0.0
    %879 = vmatpush1.msra.mxu0 %v848
    %880 = vmatprep.subr.mxu0 0.0
    %881 = vmatpush1.msra.mxu0 %v849
    %882 = vmatprep.subr.mxu0 0.0
    %883 = vmatpush1.msra.mxu0 0.0
    %884 = vmatprep.subr.mxu0 0.0
    %885 = vmatpush1.msra.mxu0 0.0
    %886 = vmatprep.subr.mxu0 0.0
    %887 = vmatpush1.msra.mxu0 0.0
    %888 = vmatprep.subr.mxu0 0.0
    %889 = vmatpush1.msra.mxu0 0.0
    %890 = vmatprep.subr.mxu0 0.0
    %891 = vmatpush1.msra.mxu0 0.0
    %892 = vmatprep.subr.mxu0 0.0
    %893 = vmatpush1.msra.mxu0 0.0
    %894 = vmatprep.subr.mxu0 0.0
    %895 = vmatpush1.msra.mxu0 0.0
    %896 = vmatprep.subr.mxu0 0.0
    %897 = vmatpush1.msra.mxu0 0.0
    %898 = vmatprep.subr.mxu0 0.0
    %899 = vmatpush1.msra.mxu0 0.0
    %900 = vmatprep.subr.mxu0 0.0
    %901 = vmatpush1.msra.mxu0 0.0
    %902 = vmatprep.subr.mxu0 0.0
    %903 = vmatpush1.msra.mxu0 0.0
    %904 = vmatprep.subr.mxu0 0.0
    %905 = vmatpush1.msra.mxu0 0.0
    %906 = vmatprep.subr.mxu0 0.0
    %907 = vmatpush1.msra.mxu0 0.0
    %908 = vmatprep.subr.mxu0 0.0
    %909 = vmatpush1.msra.mxu0 0.0
    %910 = vmatprep.subr.mxu0 0.0
    %911 = vmatpush1.msra.mxu0 0.0
    %912 = vmatprep.subr.mxu0 0.0
    %913 = vmatpush1.msra.mxu0 0.0
    %914 = vmatprep.mubr.f32.mxu0 0.0
    %915 = vmatmul.mubr.f32.gmra.mrb[0].mxu0 %v829
    %v916 = vpop.f32.mrb[0].mxu0
    %v917 = vadd.f32 0.0, %v916
    %v918 = vpop.f32.mrb[0].mxu0
    %919 = vmatprep.mubr.f32.mxu0 0.0
    %920 = vmatmul.mubr.f32.gmra.mrb[0].mxu0 %v830
    %v921 = vpop.f32.mrb[0].mxu0
    %v922 = vadd.f32 0.0, %v921
    %v923 = vpop.f32.mrb[0].mxu0
    %924 = vmatprep.mubr.f32.mxu0 0.0
    %925 = vmatmul.mubr.f32.gmra.mrb[0].mxu0 %v831
    %v926 = vpop.f32.mrb[0].mxu0
    %v927 = vadd.f32 0.0, %v926
    %v928 = vpop.f32.mrb[0].mxu0
    %929 = vmatprep.mubr.f32.mxu0 0.0
    %930 = vmatmul.mubr.f32.gmra.mrb[0].mxu0 %v832
    %v931 = vpop.f32.mrb[0].mxu0
    %v932 = vadd.f32 0.0, %v931
    %v933 = vpop.f32.mrb[0].mxu0
    %934 = vdwg.mxu0
    %v935 = vadd.f32 %v917, %v922
    %v936 = vadd.f32 %v935, %v927
    %v937 = vadd.f32 %v936, %v932
    %v938 = vrot.slane %v937, 4
    %v939 = vadd.f32 %v937, %v938
    %v940 = vrot.slane %v939, 2
    %v941 = vadd.f32 %v939, %v940
    %v942 = vrot.slane %v941, 1
    %v943 = vadd.f32 %v941, %v942
    %v944 = vmul.f32 %v943, 0.001953125
    %v945 = vmul.f32 %v829, %v829
    %v946 = vmul.f32 %v830, %v830
    %v947 = vmul.f32 %v831, %v831
    %v948 = vmul.f32 %v832, %v832
    %949 = vmatprep.subr.mxu0 0.0
    %950 = vmatpush1.msra.mxu0 %v834
    %951 = vmatprep.subr.mxu0 0.0
    %952 = vmatpush1.msra.mxu0 %v835
    %953 = vmatprep.subr.mxu0 0.0
    %954 = vmatpush1.msra.mxu0 %v836
    %955 = vmatprep.subr.mxu0 0.0
    %956 = vmatpush1.msra.mxu0 %v837
    %957 = vmatprep.subr.mxu0 0.0
    %958 = vmatpush1.msra.mxu0 %v838
    %959 = vmatprep.subr.mxu0 0.0
    %960 = vmatpush1.msra.mxu0 %v839
    %961 = vmatprep.subr.mxu0 0.0
    %962 = vmatpush1.msra.mxu0 %v840
    %963 = vmatprep.subr.mxu0 0.0
    %964 = vmatpush1.msra.mxu0 %v841
    %965 = vmatprep.subr.mxu0 0.0
    %966 = vmatpush1.msra.mxu0 %v842
    %967 = vmatprep.subr.mxu0 0.0
    %968 = vmatpush1.msra.mxu0 %v843
    %969 = vmatprep.subr.mxu0 0.0
    %970 = vmatpush1.msra.mxu0 %v844
    %971 = vmatprep.subr.mxu0 0.0
    %972 = vmatpush1.msra.mxu0 %v845
    %973 = vmatprep.subr.mxu0 0.0
    %974 = vmatpush1.msra.mxu0 %v846
    %975 = vmatprep.subr.mxu0 0.0
    %976 = vmatpush1.msra.mxu0 %v847
    %977 = vmatprep.subr.mxu0 0.0
    %978 = vmatpush1.msra.mxu0 %v848
    %979 = vmatprep.subr.mxu0 0.0
    %980 = vmatpush1.msra.mxu0 %v849
    %981 = vmatprep.subr.mxu0 0.0
    %982 = vmatpush1.msra.mxu0 0.0
    %983 = vmatprep.subr.mxu0 0.0
    %984 = vmatpush1.msra.mxu0 0.0
    %985 = vmatprep.subr.mxu0 0.0
    %986 = vmatpush1.msra.mxu0 0.0
    %987 = vmatprep.subr.mxu0 0.0
    %988 = vmatpush1.msra.mxu0 0.0
    %989 = vmatprep.subr.mxu0 0.0
    %990 = vmatpush1.msra.mxu0 0.0
    %991 = vmatprep.subr.mxu0 0.0
    %992 = vmatpush1.msra.mxu0 0.0
    %993 = vmatprep.subr.mxu0 0.0
    %994 = vmatpush1.msra.mxu0 0.0
    %995 = vmatprep.subr.mxu0 0.0
    %996 = vmatpush1.msra.mxu0 0.0
    %997 = vmatprep.subr.mxu0 0.0
    %998 = vmatpush1.msra.mxu0 0.0
    %999 = vmatprep.subr.mxu0 0.0
    %1000 = vmatpush1.msra.mxu0 0.0
    %1001 = vmatprep.subr.mxu0 0.0
    %1002 = vmatpush1.msra.mxu0 0.0
    %1003 = vmatprep.subr.mxu0 0.0
    %1004 = vmatpush1.msra.mxu0 0.0
    %1005 = vmatprep.subr.mxu0 0.0
    %1006 = vmatpush1.msra.mxu0 0.0
    %1007 = vmatprep.subr.mxu0 0.0
    %1008 = vmatpush1.msra.mxu0 0.0
    %1009 = vmatprep.subr.mxu0 0.0
    %1010 = vmatpush1.msra.mxu0 0.0
    %1011 = vmatprep.subr.mxu0 0.0
    %1012 = vmatpush1.msra.mxu0 0.0
    %1013 = vmatprep.mubr.f32.mxu0 0.0
    %1014 = vmatmul.mubr.f32.gmra.mrb[0].mxu0 %v945
    %v1015 = vpop.f32.mrb[0].mxu0
    %v1016 = vadd.f32 0.0, %v1015
    %v1017 = vpop.f32.mrb[0].mxu0
    %1018 = vmatprep.mubr.f32.mxu0 0.0
    %1019 = vmatmul.mubr.f32.gmra.mrb[0].mxu0 %v946
    %v1020 = vpop.f32.mrb[0].mxu0
    %v1021 = vadd.f32 0.0, %v1020
    %v1022 = vpop.f32.mrb[0].mxu0
    %1023 = vmatprep.mubr.f32.mxu0 0.0
    %1024 = vmatmul.mubr.f32.gmra.mrb[0].mxu0 %v947
    %v1025 = vpop.f32.mrb[0].mxu0
    %v1026 = vadd.f32 0.0, %v1025
    %v1027 = vpop.f32.mrb[0].mxu0
    %1028 = vmatprep.mubr.f32.mxu0 0.0
    %1029 = vmatmul.mubr.f32.gmra.mrb[0].mxu0 %v948
    %v1030 = vpop.f32.mrb[0].mxu0
    %v1031 = vadd.f32 0.0, %v1030
    %v1032 = vpop.f32.mrb[0].mxu0
    %1033 = vdwg.mxu0
    %v1034 = vadd.f32 %v1016, %v1021
    %v1035 = vadd.f32 %v1034, %v1026
    %v1036 = vadd.f32 %v1035, %v1031
    %v1037 = vrot.slane %v1036, 4
    %v1038 = vadd.f32 %v1036, %v1037
    %v1039 = vrot.slane %v1038, 2
    %v1040 = vadd.f32 %v1038, %v1039
    %v1041 = vrot.slane %v1040, 1
    %v1042 = vadd.f32 %v1040, %v1041
    %v1043 = vmul.f32 %v1042, 0.001953125
    %v1044 = vmul.f32 %v944, %v944
    %v1045 = vsub.f32 %v1043, %v1044
    %v1046 = vmax.f32 %v1045, 0.0
    %v1047 = vsub.f32 %v829, %v944
    %v1048 = vsub.f32 %v830, %v944
    %v1049 = vsub.f32 %v831, %v944
    %v1050 = vsub.f32 %v832, %v944
    %v1051 = vadd.f32 %v1046, 1e-05
    %v1052 = vrsqrt.pop %v1051
    %v1053 = vmul.f32 %v1047, %v1052
    %v1054 = vmul.f32 %v1048, %v1052
    %v1055 = vmul.f32 %v1049, %v1052
    %v1056 = vmul.f32 %v1050, %v1052
    %v1057 = vlaneseq
    %v1058 = vshrl.u32 %v1057, 7
    %v1059 = vsub.s32 0, %v1058
    %v1060 = vrot.slane %v66, %v1059
    %v1061 = vmul.f32 %v1053, %v1060
    %v1062 = vmul.f32 %v1054, %v1060
    %v1063 = vmul.f32 %v1055, %v1060
    %v1064 = vmul.f32 %v1056, %v1060
    %v1065 = vlaneseq
    %v1066 = vshrl.u32 %v1065, 7
    %v1067 = vsub.s32 0, %v1066
    %v1068 = vrot.slane %v67, %v1067
    %v1069 = vadd.f32 %v1061, %v1068
    %v1070 = vadd.f32 %v1062, %v1068
    %v1071 = vadd.f32 %v1063, %v1068
    %v1072 = vadd.f32 %v1064, %v1068
    %v1073 = vmax.f32 %v1069, 0.0
    %v1074 = vmax.f32 %v1070, 0.0
    %v1075 = vmax.f32 %v1071, 0.0
    %v1076 = vmax.f32 %v1072, 0.0
    %1077 = vmatprep.subr.mxu0 0.0
    %1078 = vmatpush1.msra.mxu0 %v1073
    %1079 = vmatprep.subr.mxu0 0.0
    %1080 = vmatpush1.msra.mxu0 %v1074
    %1081 = vmatprep.subr.mxu0 0.0
    %1082 = vmatpush1.msra.mxu0 %v1075
    %1083 = vmatprep.subr.mxu0 0.0
    %1084 = vmatpush1.msra.mxu0 %v1076
    %1085 = vmatprep.subr.mxu0 0.0
    %1086 = vmatpush1.msra.mxu0 0.0
    %1087 = vmatprep.subr.mxu0 0.0
    %1088 = vmatpush1.msra.mxu0 0.0
    %1089 = vmatprep.subr.mxu0 0.0
    %1090 = vmatpush1.msra.mxu0 0.0
    %1091 = vmatprep.subr.mxu0 0.0
    %1092 = vmatpush1.msra.mxu0 0.0
    %1093 = vmatprep.subr.mxu0 0.0
    %1094 = vmatpush1.msra.mxu0 0.0
    %1095 = vmatprep.subr.mxu0 0.0
    %1096 = vmatpush1.msra.mxu0 0.0
    %1097 = vmatprep.subr.mxu0 0.0
    %1098 = vmatpush1.msra.mxu0 0.0
    %1099 = vmatprep.subr.mxu0 0.0
    %1100 = vmatpush1.msra.mxu0 0.0
    %1101 = vmatprep.subr.mxu0 0.0
    %1102 = vmatpush1.msra.mxu0 0.0
    %1103 = vmatprep.subr.mxu0 0.0
    %1104 = vmatpush1.msra.mxu0 0.0
    %1105 = vmatprep.subr.mxu0 0.0
    %1106 = vmatpush1.msra.mxu0 0.0
    %1107 = vmatprep.subr.mxu0 0.0
    %1108 = vmatpush1.msra.mxu0 0.0
    %1109 = vmatprep.subr.mxu0 0.0
    %1110 = vmatpush1.msra.mxu0 0.0
    %1111 = vmatprep.subr.mxu0 0.0
    %1112 = vmatpush1.msra.mxu0 0.0
    %1113 = vmatprep.subr.mxu0 0.0
    %1114 = vmatpush1.msra.mxu0 0.0
    %1115 = vmatprep.subr.mxu0 0.0
    %1116 = vmatpush1.msra.mxu0 0.0
    %1117 = vmatprep.subr.mxu0 0.0
    %1118 = vmatpush1.msra.mxu0 0.0
    %1119 = vmatprep.subr.mxu0 0.0
    %1120 = vmatpush1.msra.mxu0 0.0
    %1121 = vmatprep.subr.mxu0 0.0
    %1122 = vmatpush1.msra.mxu0 0.0
    %1123 = vmatprep.subr.mxu0 0.0
    %1124 = vmatpush1.msra.mxu0 0.0
    %1125 = vmatprep.subr.mxu0 0.0
    %1126 = vmatpush1.msra.mxu0 0.0
    %1127 = vmatprep.subr.mxu0 0.0
    %1128 = vmatpush1.msra.mxu0 0.0
    %1129 = vmatprep.subr.mxu0 0.0
    %1130 = vmatpush1.msra.mxu0 0.0
    %1131 = vmatprep.subr.mxu0 0.0
    %1132 = vmatpush1.msra.mxu0 0.0
    %1133 = vmatprep.subr.mxu0 0.0
    %1134 = vmatpush1.msra.mxu0 0.0
    %1135 = vmatprep.subr.mxu0 0.0
    %1136 = vmatpush1.msra.mxu0 0.0
    %1137 = vmatprep.subr.mxu0 0.0
    %1138 = vmatpush1.msra.mxu0 0.0
    %1139 = vmatprep.subr.mxu0 0.0
    %1140 = vmatpush1.msra.mxu0 0.0
    %1141 = vmatprep.mubr.f32.mxu0 0.0
    %1142 = vmatmul.mubr.f32.gmra.mrb[0].mxu0 %v322
    %v1143 = vpop.f32.mrb[0].mxu0
    %v1144 = vadd.f32 0.0, %v1143
    %v1145 = vpop.f32.mrb[0].mxu0
    %1146 = vmatprep.mubr.f32.mxu0 0.0
    %1147 = vmatmul.mubr.f32.gmra.mrb[0].mxu0 %v325
    %v1148 = vpop.f32.mrb[0].mxu0
    %v1149 = vadd.f32 0.0, %v1148
    %v1150 = vpop.f32.mrb[0].mxu0
    %1151 = vmatprep.mubr.f32.mxu0 0.0
    %1152 = vmatmul.mubr.f32.gmra.mrb[0].mxu0 %v328
    %v1153 = vpop.f32.mrb[0].mxu0
    %v1154 = vadd.f32 0.0, %v1153
    %v1155 = vpop.f32.mrb[0].mxu0
    %1156 = vmatprep.mubr.f32.mxu0 0.0
    %1157 = vmatmul.mubr.f32.gmra.mrb[0].mxu0 %v331
    %v1158 = vpop.f32.mrb[0].mxu0
    %v1159 = vadd.f32 0.0, %v1158
    %v1160 = vpop.f32.mrb[0].mxu0
    %1161 = vdwg.mxu0
    %1162 = vmatprep.subr.mxu0 0.0
    %1163 = vmatpush1.msra.mxu0 %v1073
    %1164 = vmatprep.subr.mxu0 0.0
    %1165 = vmatpush1.msra.mxu0 %v1074
    %1166 = vmatprep.subr.mxu0 0.0
    %1167 = vmatpush1.msra.mxu0 %v1075
    %1168 = vmatprep.subr.mxu0 0.0
    %1169 = vmatpush1.msra.mxu0 %v1076
    %1170 = vmatprep.subr.mxu0 0.0
    %1171 = vmatpush1.msra.mxu0 0.0
    %1172 = vmatprep.subr.mxu0 0.0
    %1173 = vmatpush1.msra.mxu0 0.0
    %1174 = vmatprep.subr.mxu0 0.0
    %1175 = vmatpush1.msra.mxu0 0.0
    %1176 = vmatprep.subr.mxu0 0.0
    %1177 = vmatpush1.msra.mxu0 0.0
    %1178 = vmatprep.subr.mxu0 0.0
    %1179 = vmatpush1.msra.mxu0 0.0
    %1180 = vmatprep.subr.mxu0 0.0
    %1181 = vmatpush1.msra.mxu0 0.0
    %1182 = vmatprep.subr.mxu0 0.0
    %1183 = vmatpush1.msra.mxu0 0.0
    %1184 = vmatprep.subr.mxu0 0.0
    %1185 = vmatpush1.msra.mxu0 0.0
    %1186 = vmatprep.subr.mxu0 0.0
    %1187 = vmatpush1.msra.mxu0 0.0
    %1188 = vmatprep.subr.mxu0 0.0
    %1189 = vmatpush1.msra.mxu0 0.0
    %1190 = vmatprep.subr.mxu0 0.0
    %1191 = vmatpush1.msra.mxu0 0.0
    %1192 = vmatprep.subr.mxu0 0.0
    %1193 = vmatpush1.msra.mxu0 0.0
    %1194 = vmatprep.subr.mxu0 0.0
    %1195 = vmatpush1.msra.mxu0 0.0
    %1196 = vmatprep.subr.mxu0 0.0
    %1197 = vmatpush1.msra.mxu0 0.0
    %1198 = vmatprep.subr.mxu0 0.0
    %1199 = vmatpush1.msra.mxu0 0.0
    %1200 = vmatprep.subr.mxu0 0.0
    %1201 = vmatpush1.msra.mxu0 0.0
    %1202 = vmatprep.subr.mxu0 0.0
    %1203 = vmatpush1.msra.mxu0 0.0
    %1204 = vmatprep.subr.mxu0 0.0
    %1205 = vmatpush1.msra.mxu0 0.0
    %1206 = vmatprep.subr.mxu0 0.0
    %1207 = vmatpush1.msra.mxu0 0.0
    %1208 = vmatprep.subr.mxu0 0.0
    %1209 = vmatpush1.msra.mxu0 0.0
    %1210 = vmatprep.subr.mxu0 0.0
    %1211 = vmatpush1.msra.mxu0 0.0
    %1212 = vmatprep.subr.mxu0 0.0
    %1213 = vmatpush1.msra.mxu0 0.0
    %1214 = vmatprep.subr.mxu0 0.0
    %1215 = vmatpush1.msra.mxu0 0.0
    %1216 = vmatprep.subr.mxu0 0.0
    %1217 = vmatpush1.msra.mxu0 0.0
    %1218 = vmatprep.subr.mxu0 0.0
    %1219 = vmatpush1.msra.mxu0 0.0
    %1220 = vmatprep.subr.mxu0 0.0
    %1221 = vmatpush1.msra.mxu0 0.0
    %1222 = vmatprep.subr.mxu0 0.0
    %1223 = vmatpush1.msra.mxu0 0.0
    %1224 = vmatprep.subr.mxu0 0.0
    %1225 = vmatpush1.msra.mxu0 0.0
    %1226 = vmatprep.mubr.f32.mxu0 0.0
    %1227 = vmatmul.mubr.f32.gmra.mrb[0].mxu0 %v419
    %v1228 = vpop.f32.mrb[0].mxu0
    %v1229 = vadd.f32 0.0, %v1228
    %v1230 = vpop.f32.mrb[0].mxu0
    %1231 = vmatprep.mubr.f32.mxu0 0.0
    %1232 = vmatmul.mubr.f32.gmra.mrb[0].mxu0 %v422
    %v1233 = vpop.f32.mrb[0].mxu0
    %v1234 = vadd.f32 0.0, %v1233
    %v1235 = vpop.f32.mrb[0].mxu0
    %1236 = vmatprep.mubr.f32.mxu0 0.0
    %1237 = vmatmul.mubr.f32.gmra.mrb[0].mxu0 %v425
    %v1238 = vpop.f32.mrb[0].mxu0
    %v1239 = vadd.f32 0.0, %v1238
    %v1240 = vpop.f32.mrb[0].mxu0
    %1241 = vmatprep.mubr.f32.mxu0 0.0
    %1242 = vmatmul.mubr.f32.gmra.mrb[0].mxu0 %v428
    %v1243 = vpop.f32.mrb[0].mxu0
    %v1244 = vadd.f32 0.0, %v1243
    %v1245 = vpop.f32.mrb[0].mxu0
    %1246 = vdwg.mxu0
    %s1247 = scalar_lea.vmem [#allocation5], 768
    %v1248 = vld [vmem:[%s1247] sm:$0xff]
    %v1249 = vld [vmem:[%s1247 + $0x8] sm:$0xff]
    %v1250 = vld [vmem:[%s1247 + $0x10] sm:$0xff]
    %v1251 = vld [vmem:[%s1247 + $0x18] sm:$0xff]
    %v1252 = vld [vmem:[%s1247 + $0x20] sm:$0xff]
    %v1253 = vld [vmem:[%s1247 + $0x28] sm:$0xff]
    %v1254 = vld [vmem:[%s1247 + $0x30] sm:$0xff]
    %v1255 = vld [vmem:[%s1247 + $0x38] sm:$0xff]
    %v1256 = vld [vmem:[%s1247 + $0x40] sm:$0xff]
    %v1257 = vld [vmem:[%s1247 + $0x48] sm:$0xff]
    %v1258 = vld [vmem:[%s1247 + $0x50] sm:$0xff]
    %v1259 = vld [vmem:[%s1247 + $0x58] sm:$0xff]
    %v1260 = vld [vmem:[%s1247 + $0x60] sm:$0xff]
    %v1261 = vld [vmem:[%s1247 + $0x68] sm:$0xff]
    %v1262 = vld [vmem:[%s1247 + $0x70] sm:$0xff]
    %v1263 = vld [vmem:[%s1247 + $0x78] sm:$0xff]
    %s1264 = scalar_lea.vmem [#allocation5], 896
    %v1265 = vld [vmem:[%s1264] sm:$0xff]
    %v1266 = vld [vmem:[%s1264 + $0x8] sm:$0xff]
    %v1267 = vld [vmem:[%s1264 + $0x10] sm:$0xff]
    %v1268 = vld [vmem:[%s1264 + $0x18] sm:$0xff]
    %v1269 = vld [vmem:[%s1264 + $0x20] sm:$0xff]
    %v1270 = vld [vmem:[%s1264 + $0x28] sm:$0xff]
    %v1271 = vld [vmem:[%s1264 + $0x30] sm:$0xff]
    %v1272 = vld [vmem:[%s1264 + $0x38] sm:$0xff]
    %v1273 = vld [vmem:[%s1264 + $0x40] sm:$0xff]
    %v1274 = vld [vmem:[%s1264 + $0x48] sm:$0xff]
    %v1275 = vld [vmem:[%s1264 + $0x50] sm:$0xff]
    %v1276 = vld [vmem:[%s1264 + $0x58] sm:$0xff]
    %v1277 = vld [vmem:[%s1264 + $0x60] sm:$0xff]
    %v1278 = vld [vmem:[%s1264 + $0x68] sm:$0xff]
    %v1279 = vld [vmem:[%s1264 + $0x70] sm:$0xff]
    %v1280 = vld [vmem:[%s1264 + $0x78] sm:$0xff]
    %1281 = vmatprep.subr.mxu0 0.0
    %1282 = vmatpush1.msra.mxu0 %v1265
    %1283 = vmatprep.subr.mxu0 0.0
    %1284 = vmatpush1.msra.mxu0 %v1266
    %1285 = vmatprep.subr.mxu0 0.0
    %1286 = vmatpush1.msra.mxu0 %v1267
    %1287 = vmatprep.subr.mxu0 0.0
    %1288 = vmatpush1.msra.mxu0 %v1268
    %1289 = vmatprep.subr.mxu0 0.0
    %1290 = vmatpush1.msra.mxu0 %v1269
    %1291 = vmatprep.subr.mxu0 0.0
    %1292 = vmatpush1.msra.mxu0 %v1270
    %1293 = vmatprep.subr.mxu0 0.0
    %1294 = vmatpush1.msra.mxu0 %v1271
    %1295 = vmatprep.subr.mxu0 0.0
    %1296 = vmatpush1.msra.mxu0 %v1272
    %1297 = vmatprep.subr.mxu0 0.0
    %1298 = vmatpush1.msra.mxu0 %v1273
    %1299 = vmatprep.subr.mxu0 0.0
    %1300 = vmatpush1.msra.mxu0 %v1274
    %1301 = vmatprep.subr.mxu0 0.0
    %1302 = vmatpush1.msra.mxu0 %v1275
    %1303 = vmatprep.subr.mxu0 0.0
    %1304 = vmatpush1.msra.mxu0 %v1276
    %1305 = vmatprep.subr.mxu0 0.0
    %1306 = vmatpush1.msra.mxu0 %v1277
    %1307 = vmatprep.subr.mxu0 0.0
    %1308 = vmatpush1.msra.mxu0 %v1278
    %1309 = vmatprep.subr.mxu0 0.0
    %1310 = vmatpush1.msra.mxu0 %v1279
    %1311 = vmatprep.subr.mxu0 0.0
    %1312 = vmatpush1.msra.mxu0 %v1280
    %1313 = vmatprep.subr.mxu0 0.0
    %1314 = vmatpush1.msra.mxu0 0.0
    %1315 = vmatprep.subr.mxu0 0.0
    %1316 = vmatpush1.msra.mxu0 0.0
    %1317 = vmatprep.subr.mxu0 0.0
    %1318 = vmatpush1.msra.mxu0 0.0
    %1319 = vmatprep.subr.mxu0 0.0
    %1320 = vmatpush1.msra.mxu0 0.0
    %1321 = vmatprep.subr.mxu0 0.0
    %1322 = vmatpush1.msra.mxu0 0.0
    %1323 = vmatprep.subr.mxu0 0.0
    %1324 = vmatpush1.msra.mxu0 0.0
    %1325 = vmatprep.subr.mxu0 0.0
    %1326 = vmatpush1.msra.mxu0 0.0
    %1327 = vmatprep.subr.mxu0 0.0
    %1328 = vmatpush1.msra.mxu0 0.0
    %1329 = vmatprep.subr.mxu0 0.0
    %1330 = vmatpush1.msra.mxu0 0.0
    %1331 = vmatprep.subr.mxu0 0.0
    %1332 = vmatpush1.msra.mxu0 0.0
    %1333 = vmatprep.subr.mxu0 0.0
    %1334 = vmatpush1.msra.mxu0 0.0
    %1335 = vmatprep.subr.mxu0 0.0
    %1336 = vmatpush1.msra.mxu0 0.0
    %1337 = vmatprep.subr.mxu0 0.0
    %1338 = vmatpush1.msra.mxu0 0.0
    %1339 = vmatprep.subr.mxu0 0.0
    %1340 = vmatpush1.msra.mxu0 0.0
    %1341 = vmatprep.subr.mxu0 0.0
    %1342 = vmatpush1.msra.mxu0 0.0
    %1343 = vmatprep.subr.mxu0 0.0
    %1344 = vmatpush1.msra.mxu0 0.0
    %1345 = vmatprep.mubr.f32.mxu0 0.0
    %1346 = vmatmul.mubr.f32.gmra.mrb[0].mxu0 %v1073
    %v1347 = vpop.f32.mrb[0].mxu0
    %v1348 = vadd.f32 0.0, %v1347
    %v1349 = vpop.f32.mrb[0].mxu0
    %1350 = vmatprep.mubr.f32.mxu0 0.0
    %1351 = vmatmul.mubr.f32.gmra.mrb[0].mxu0 %v1074
    %v1352 = vpop.f32.mrb[0].mxu0
    %v1353 = vadd.f32 0.0, %v1352
    %v1354 = vpop.f32.mrb[0].mxu0
    %1355 = vmatprep.mubr.f32.mxu0 0.0
    %1356 = vmatmul.mubr.f32.gmra.mrb[0].mxu0 %v1075
    %v1357 = vpop.f32.mrb[0].mxu0
    %v1358 = vadd.f32 0.0, %v1357
    %v1359 = vpop.f32.mrb[0].mxu0
    %1360 = vmatprep.mubr.f32.mxu0 0.0
    %1361 = vmatmul.mubr.f32.gmra.mrb[0].mxu0 %v1076
    %v1362 = vpop.f32.mrb[0].mxu0
    %v1363 = vadd.f32 0.0, %v1362
    %v1364 = vpop.f32.mrb[0].mxu0
    %1365 = vdwg.mxu0
    %1366 = vmatprep.subr.mxu0 0.0
    %1367 = vmatpush1.msra.mxu0 %v1248
    %1368 = vmatprep.subr.mxu0 0.0
    %1369 = vmatpush1.msra.mxu0 %v1249
    %1370 = vmatprep.subr.mxu0 0.0
    %1371 = vmatpush1.msra.mxu0 %v1250
    %1372 = vmatprep.subr.mxu0 0.0
    %1373 = vmatpush1.msra.mxu0 %v1251
    %1374 = vmatprep.subr.mxu0 0.0
    %1375 = vmatpush1.msra.mxu0 %v1252
    %1376 = vmatprep.subr.mxu0 0.0
    %1377 = vmatpush1.msra.mxu0 %v1253
    %1378 = vmatprep.subr.mxu0 0.0
    %1379 = vmatpush1.msra.mxu0 %v1254
    %1380 = vmatprep.subr.mxu0 0.0
    %1381 = vmatpush1.msra.mxu0 %v1255
    %1382 = vmatprep.subr.mxu0 0.0
    %1383 = vmatpush1.msra.mxu0 %v1256
    %1384 = vmatprep.subr.mxu0 0.0
    %1385 = vmatpush1.msra.mxu0 %v1257
    %1386 = vmatprep.subr.mxu0 0.0
    %1387 = vmatpush1.msra.mxu0 %v1258
    %1388 = vmatprep.subr.mxu0 0.0
    %1389 = vmatpush1.msra.mxu0 %v1259
    %1390 = vmatprep.subr.mxu0 0.0
    %1391 = vmatpush1.msra.mxu0 %v1260
    %1392 = vmatprep.subr.mxu0 0.0
    %1393 = vmatpush1.msra.mxu0 %v1261
    %1394 = vmatprep.subr.mxu0 0.0
    %1395 = vmatpush1.msra.mxu0 %v1262
    %1396 = vmatprep.subr.mxu0 0.0
    %1397 = vmatpush1.msra.mxu0 %v1263
    %1398 = vmatprep.subr.mxu0 0.0
    %1399 = vmatpush1.msra.mxu0 0.0
    %1400 = vmatprep.subr.mxu0 0.0
    %1401 = vmatpush1.msra.mxu0 0.0
    %1402 = vmatprep.subr.mxu0 0.0
    %1403 = vmatpush1.msra.mxu0 0.0
    %1404 = vmatprep.subr.mxu0 0.0
    %1405 = vmatpush1.msra.mxu0 0.0
    %1406 = vmatprep.subr.mxu0 0.0
    %1407 = vmatpush1.msra.mxu0 0.0
    %1408 = vmatprep.subr.mxu0 0.0
    %1409 = vmatpush1.msra.mxu0 0.0
    %1410 = vmatprep.subr.mxu0 0.0
    %1411 = vmatpush1.msra.mxu0 0.0
    %1412 = vmatprep.subr.mxu0 0.0
    %1413 = vmatpush1.msra.mxu0 0.0
    %1414 = vmatprep.subr.mxu0 0.0
    %1415 = vmatpush1.msra.mxu0 0.0
    %1416 = vmatprep.subr.mxu0 0.0
    %1417 = vmatpush1.msra.mxu0 0.0
    %1418 = vmatprep.subr.mxu0 0.0
    %1419 = vmatpush1.msra.mxu0 0.0
    %1420 = vmatprep.subr.mxu0 0.0
    %1421 = vmatpush1.msra.mxu0 0.0
    %1422 = vmatprep.subr.mxu0 0.0
    %1423 = vmatpush1.msra.mxu0 0.0
    %1424 = vmatprep.subr.mxu0 0.0
    %1425 = vmatpush1.msra.mxu0 0.0
    %1426 = vmatprep.subr.mxu0 0.0
    %1427 = vmatpush1.msra.mxu0 0.0
    %1428 = vmatprep.subr.mxu0 0.0
    %1429 = vmatpush1.msra.mxu0 0.0
    %1430 = vmatprep.mubr.f32.mxu0 0.0
    %1431 = vmatmul.mubr.f32.gmra.mrb[0].mxu0 %v1144
    %v1432 = vpop.f32.mrb[0].mxu0
    %v1433 = vadd.f32 %v1348, %v1432
    %v1434 = vpop.f32.mrb[0].mxu0
    %1435 = vmatprep.mubr.f32.mxu0 0.0
    %1436 = vmatmul.mubr.f32.gmra.mrb[0].mxu0 %v1149
    %v1437 = vpop.f32.mrb[0].mxu0
    %v1438 = vadd.f32 %v1353, %v1437
    %v1439 = vpop.f32.mrb[0].mxu0
    %1440 = vmatprep.mubr.f32.mxu0 0.0
    %1441 = vmatmul.mubr.f32.gmra.mrb[0].mxu0 %v1154
    %v1442 = vpop.f32.mrb[0].mxu0
    %v1443 = vadd.f32 %v1358, %v1442
    %v1444 = vpop.f32.mrb[0].mxu0
    %1445 = vmatprep.mubr.f32.mxu0 0.0
    %1446 = vmatmul.mubr.f32.gmra.mrb[0].mxu0 %v1159
    %v1447 = vpop.f32.mrb[0].mxu0
    %v1448 = vadd.f32 %v1363, %v1447
    %v1449 = vpop.f32.mrb[0].mxu0
    %1450 = vdwg.mxu0
    %s1451 = scalar_lea.vmem [#allocation5], 1024
    %v1452 = vld [vmem:[%s1451] sm:$0xff]
    %v1453 = vld [vmem:[%s1451 + $0x8] sm:$0xff]
    %v1454 = vld [vmem:[%s1451 + $0x10] sm:$0xff]
    %v1455 = vld [vmem:[%s1451 + $0x18] sm:$0xff]
    %v1456 = vld [vmem:[%s1451 + $0x20] sm:$0xff]
    %v1457 = vld [vmem:[%s1451 + $0x28] sm:$0xff]
    %v1458 = vld [vmem:[%s1451 + $0x30] sm:$0xff]
    %v1459 = vld [vmem:[%s1451 + $0x38] sm:$0xff]
    %v1460 = vld [vmem:[%s1451 + $0x40] sm:$0xff]
    %v1461 = vld [vmem:[%s1451 + $0x48] sm:$0xff]
    %v1462 = vld [vmem:[%s1451 + $0x50] sm:$0xff]
    %v1463 = vld [vmem:[%s1451 + $0x58] sm:$0xff]
    %v1464 = vld [vmem:[%s1451 + $0x60] sm:$0xff]
    %v1465 = vld [vmem:[%s1451 + $0x68] sm:$0xff]
    %v1466 = vld [vmem:[%s1451 + $0x70] sm:$0xff]
    %v1467 = vld [vmem:[%s1451 + $0x78] sm:$0xff]
    %1468 = vmatprep.subr.mxu0 0.0
    %1469 = vmatpush1.msra.mxu0 %v1452
    %1470 = vmatprep.subr.mxu0 0.0
    %1471 = vmatpush1.msra.mxu0 %v1453
    %1472 = vmatprep.subr.mxu0 0.0
    %1473 = vmatpush1.msra.mxu0 %v1454
    %1474 = vmatprep.subr.mxu0 0.0
    %1475 = vmatpush1.msra.mxu0 %v1455
    %1476 = vmatprep.subr.mxu0 0.0
    %1477 = vmatpush1.msra.mxu0 %v1456
    %1478 = vmatprep.subr.mxu0 0.0
    %1479 = vmatpush1.msra.mxu0 %v1457
    %1480 = vmatprep.subr.mxu0 0.0
    %1481 = vmatpush1.msra.mxu0 %v1458
    %1482 = vmatprep.subr.mxu0 0.0
    %1483 = vmatpush1.msra.mxu0 %v1459
    %1484 = vmatprep.subr.mxu0 0.0
    %1485 = vmatpush1.msra.mxu0 %v1460
    %1486 = vmatprep.subr.mxu0 0.0
    %1487 = vmatpush1.msra.mxu0 %v1461
    %1488 = vmatprep.subr.mxu0 0.0
    %1489 = vmatpush1.msra.mxu0 %v1462
    %1490 = vmatprep.subr.mxu0 0.0
    %1491 = vmatpush1.msra.mxu0 %v1463
    %1492 = vmatprep.subr.mxu0 0.0
    %1493 = vmatpush1.msra.mxu0 %v1464
    %1494 = vmatprep.subr.mxu0 0.0
    %1495 = vmatpush1.msra.mxu0 %v1465
    %1496 = vmatprep.subr.mxu0 0.0
    %1497 = vmatpush1.msra.mxu0 %v1466
    %1498 = vmatprep.subr.mxu0 0.0
    %1499 = vmatpush1.msra.mxu0 %v1467
    %1500 = vmatprep.subr.mxu0 0.0
    %1501 = vmatpush1.msra.mxu0 0.0
    %1502 = vmatprep.subr.mxu0 0.0
    %1503 = vmatpush1.msra.mxu0 0.0
    %1504 = vmatprep.subr.mxu0 0.0
    %1505 = vmatpush1.msra.mxu0 0.0
    %1506 = vmatprep.subr.mxu0 0.0
    %1507 = vmatpush1.msra.mxu0 0.0
    %1508 = vmatprep.subr.mxu0 0.0
    %1509 = vmatpush1.msra.mxu0 0.0
    %1510 = vmatprep.subr.mxu0 0.0
    %1511 = vmatpush1.msra.mxu0 0.0
    %1512 = vmatprep.subr.mxu0 0.0
    %1513 = vmatpush1.msra.mxu0 0.0
    %1514 = vmatprep.subr.mxu0 0.0
    %1515 = vmatpush1.msra.mxu0 0.0
    %1516 = vmatprep.subr.mxu0 0.0
    %1517 = vmatpush1.msra.mxu0 0.0
    %1518 = vmatprep.subr.mxu0 0.0
    %1519 = vmatpush1.msra.mxu0 0.0
    %1520 = vmatprep.subr.mxu0 0.0
    %1521 = vmatpush1.msra.mxu0 0.0
    %1522 = vmatprep.subr.mxu0 0.0
    %1523 = vmatpush1.msra.mxu0 0.0
    %1524 = vmatprep.subr.mxu0 0.0
    %1525 = vmatpush1.msra.mxu0 0.0
    %1526 = vmatprep.subr.mxu0 0.0
    %1527 = vmatpush1.msra.mxu0 0.0
    %1528 = vmatprep.subr.mxu0 0.0
    %1529 = vmatpush1.msra.mxu0 0.0
    %1530 = vmatprep.subr.mxu0 0.0
    %1531 = vmatpush1.msra.mxu0 0.0
    %1532 = vmatprep.mubr.f32.mxu0 0.0
    %1533 = vmatmul.mubr.f32.gmra.mrb[0].mxu0 %v1229
    %v1534 = vpop.f32.mrb[0].mxu0
    %v1535 = vadd.f32 0.0, %v1534
    %v1536 = vpop.f32.mrb[0].mxu0
    %1537 = vmatprep.mubr.f32.mxu0 0.0
    %1538 = vmatmul.mubr.f32.gmra.mrb[0].mxu0 %v1234
    %v1539 = vpop.f32.mrb[0].mxu0
    %v1540 = vadd.f32 0.0, %v1539
    %v1541 = vpop.f32.mrb[0].mxu0
    %1542 = vmatprep.mubr.f32.mxu0 0.0
    %1543 = vmatmul.mubr.f32.gmra.mrb[0].mxu0 %v1239
    %v1544 = vpop.f32.mrb[0].mxu0
    %v1545 = vadd.f32 0.0, %v1544
    %v1546 = vpop.f32.mrb[0].mxu0
    %1547 = vmatprep.mubr.f32.mxu0 0.0
    %1548 = vmatmul.mubr.f32.gmra.mrb[0].mxu0 %v1244
    %v1549 = vpop.f32.mrb[0].mxu0
    %v1550 = vadd.f32 0.0, %v1549
    %v1551 = vpop.f32.mrb[0].mxu0
    %1552 = vdwg.mxu0
    %v1553 = vadd.f32 %v1433, %v1535
    %v1554 = vadd.f32 %v1438, %v1540
    %v1555 = vadd.f32 %v1443, %v1545
    %v1556 = vadd.f32 %v1448, %v1550
    %s1557 = scalar_lea.vmem [#allocation5], 256
    %v1558 = vld [vmem:[%s1557] sm:$0xff]
    %v1559 = vld [vmem:[%s1557 + $0x8] sm:$0xff]
    %v1560 = vld [vmem:[%s1557 + $0x10] sm:$0xff]
    %v1561 = vld [vmem:[%s1557 + $0x18] sm:$0xff]
    %v1562 = vld [vmem:[%s1557 + $0x20] sm:$0xff]
    %v1563 = vld [vmem:[%s1557 + $0x28] sm:$0xff]
    %v1564 = vld [vmem:[%s1557 + $0x30] sm:$0xff]
    %v1565 = vld [vmem:[%s1557 + $0x38] sm:$0xff]
    %v1566 = vld [vmem:[%s1557 + $0x40] sm:$0xff]
    %v1567 = vld [vmem:[%s1557 + $0x48] sm:$0xff]
    %v1568 = vld [vmem:[%s1557 + $0x50] sm:$0xff]
    %v1569 = vld [vmem:[%s1557 + $0x58] sm:$0xff]
    %v1570 = vld [vmem:[%s1557 + $0x60] sm:$0xff]
    %v1571 = vld [vmem:[%s1557 + $0x68] sm:$0xff]
    %v1572 = vld [vmem:[%s1557 + $0x70] sm:$0xff]
    %v1573 = vld [vmem:[%s1557 + $0x78] sm:$0xff]
    %1574 = vmatprep.subr.mxu0 0.0
    %1575 = vmatpush1.msra.mxu0 %v1558
    %1576 = vmatprep.subr.mxu0 0.0
    %1577 = vmatpush1.msra.mxu0 %v1559
    %1578 = vmatprep.subr.mxu0 0.0
    %1579 = vmatpush1.msra.mxu0 %v1560
    %1580 = vmatprep.subr.mxu0 0.0
    %1581 = vmatpush1.msra.mxu0 %v1561
    %1582 = vmatprep.subr.mxu0 0.0
    %1583 = vmatpush1.msra.mxu0 %v1562
    %1584 = vmatprep.subr.mxu0 0.0
    %1585 = vmatpush1.msra.mxu0 %v1563
    %1586 = vmatprep.subr.mxu0 0.0
    %1587 = vmatpush1.msra.mxu0 %v1564
    %1588 = vmatprep.subr.mxu0 0.0
    %1589 = vmatpush1.msra.mxu0 %v1565
    %1590 = vmatprep.subr.mxu0 0.0
    %1591 = vmatpush1.msra.mxu0 %v1566
    %1592 = vmatprep.subr.mxu0 0.0
    %1593 = vmatpush1.msra.mxu0 %v1567
    %1594 = vmatprep.subr.mxu0 0.0
    %1595 = vmatpush1.msra.mxu0 %v1568
    %1596 = vmatprep.subr.mxu0 0.0
    %1597 = vmatpush1.msra.mxu0 %v1569
    %1598 = vmatprep.subr.mxu0 0.0
    %1599 = vmatpush1.msra.mxu0 %v1570
    %1600 = vmatprep.subr.mxu0 0.0
    %1601 = vmatpush1.msra.mxu0 %v1571
    %1602 = vmatprep.subr.mxu0 0.0
    %1603 = vmatpush1.msra.mxu0 %v1572
    %1604 = vmatprep.subr.mxu0 0.0
    %1605 = vmatpush1.msra.mxu0 %v1573
    %1606 = vmatprep.subr.mxu0 0.0
    %1607 = vmatpush1.msra.mxu0 0.0
    %1608 = vmatprep.subr.mxu0 0.0
    %1609 = vmatpush1.msra.mxu0 0.0
    %1610 = vmatprep.subr.mxu0 0.0
    %1611 = vmatpush1.msra.mxu0 0.0
    %1612 = vmatprep.subr.mxu0 0.0
    %1613 = vmatpush1.msra.mxu0 0.0
    %1614 = vmatprep.subr.mxu0 0.0
    %1615 = vmatpush1.msra.mxu0 0.0
    %1616 = vmatprep.subr.mxu0 0.0
    %1617 = vmatpush1.msra.mxu0 0.0
    %1618 = vmatprep.subr.mxu0 0.0
    %1619 = vmatpush1.msra.mxu0 0.0
    %1620 = vmatprep.subr.mxu0 0.0
    %1621 = vmatpush1.msra.mxu0 0.0
    %1622 = vmatprep.subr.mxu0 0.0
    %1623 = vmatpush1.msra.mxu0 0.0
    %1624 = vmatprep.subr.mxu0 0.0
    %1625 = vmatpush1.msra.mxu0 0.0
    %1626 = vmatprep.subr.mxu0 0.0
    %1627 = vmatpush1.msra.mxu0 0.0
    %1628 = vmatprep.subr.mxu0 0.0
    %1629 = vmatpush1.msra.mxu0 0.0
    %1630 = vmatprep.subr.mxu0 0.0
    %1631 = vmatpush1.msra.mxu0 0.0
    %1632 = vmatprep.subr.mxu0 0.0
    %1633 = vmatpush1.msra.mxu0 0.0
    %1634 = vmatprep.subr.mxu0 0.0
    %1635 = vmatpush1.msra.mxu0 0.0
    %1636 = vmatprep.subr.mxu0 0.0
    %1637 = vmatpush1.msra.mxu0 0.0
    %1638 = vmatprep.mubr.f32.mxu0 0.0
    %1639 = vmatmul.mubr.f32.gmra.mrb[0].mxu0 %v316
    %v1640 = vpop.f32.mrb[0].mxu0
    %v1641 = vadd.f32 0.0, %v1640
    %v1642 = vpop.f32.mrb[0].mxu0
    %1643 = vmatprep.mubr.f32.mxu0 0.0
    %1644 = vmatmul.mubr.f32.gmra.mrb[0].mxu0 %v317
    %v1645 = vpop.f32.mrb[0].mxu0
    %v1646 = vadd.f32 0.0, %v1645
    %v1647 = vpop.f32.mrb[0].mxu0
    %1648 = vmatprep.mubr.f32.mxu0 0.0
    %1649 = vmatmul.mubr.f32.gmra.mrb[0].mxu0 %v318
    %v1650 = vpop.f32.mrb[0].mxu0
    %v1651 = vadd.f32 0.0, %v1650
    %v1652 = vpop.f32.mrb[0].mxu0
    %1653 = vmatprep.mubr.f32.mxu0 0.0
    %1654 = vmatmul.mubr.f32.gmra.mrb[0].mxu0 %v319
    %v1655 = vpop.f32.mrb[0].mxu0
    %v1656 = vadd.f32 0.0, %v1655
    %v1657 = vpop.f32.mrb[0].mxu0
    %1658 = vdwg.mxu0
    %v1659 = vadd.f32 %v1553, %v1641
    %v1660 = vadd.f32 %v1554, %v1646
    %v1661 = vadd.f32 %v1555, %v1651
    %v1662 = vadd.f32 %v1556, %v1656
    %1663 = vst [vmem:[#allocation8] sm:$0xff] %v1659
    %1664 = vst [vmem:[#allocation8 + $0x8] sm:$0xff] %v1660
    %1665 = vst [vmem:[#allocation8 + $0x10] sm:$0xff] %v1661
    %1666 = vst [vmem:[#allocation8 + $0x18] sm:$0xff] %v1662
    // Predicated region
    $region30: #{tpu_custom_call.1} parent=1 // pred_check
      _
    $region31: #{tpu_custom_call.1} parent=1 // pred_check_branch
      %1668 = sbr.rel (0) target = $region33
    $region32: #{tpu_custom_call.1} parent=1 // pred_region
      %s1670 = ssub.s32 512, 512
      %1671 = vsyncadd [#allocation4], %s1670
      %s1672 = sshll.u32 [#allocation8], 4
      %s1673 = int_to_ptr.vmem [resolvable:$true] %s1672
      %1678 = dma.vmem_to_hbm [thread:$0]  %s1673, 512, %s4, [#allocation4], 128, 128, 8
    $region33: #{tpu_custom_call.1} parent=1 // pred_fallthru
      _
    // Predicated region
    $region34: #{tpu_custom_call.1} parent=1 // pred_check
      _
    $region35: #{tpu_custom_call.1} parent=1 // pred_check_branch
      %1680 = sbr.rel (0) target = $region37
    $region36: #{tpu_custom_call.1} parent=1 // pred_region
      %1681 = dma.done [#allocation4], 512
    $region37: #{tpu_custom_call.1} parent=1 // pred_fallthru
      _
    %1682 = vsyncpa [#allocation3], 1
    %1683 = vsyncpa [#allocation6], 1
    %1684 = vsyncpa [#allocation4], 1

</llo_original>
